<compile_context>
chip_gen: v7x
topology: tpu7x:2x2x1
jax: 0.10.0
libtpu: 0.0.40
codegen_flags: <defaults>
</compile_context>

<pallas_src>
import functools
import math

import jax
import jax.numpy as jnp
from jax.experimental import pallas as pl
from jax.experimental.pallas import tpu as pltpu


# ----------------------------- Fused encoder LSTM kernel -----------------------------

def _encoder_lstm_kernel(ids_ref, emb_ref, *refs, num_layers, hidden_size, seq_len, batch):
    """Inputs : ids (S*B, 1) i32, emb (V, E) f32, then per layer
                 (w_ih_t (Din,4H), w_hh_t (H,4H), bias (1,4H)).
       Output : one lane-dense slab (B, (S + 2L)*H) f32 holding
                 [h_0 | ... | h_{S-1} | hn_0 | cn_0 | ... | hn_{L-1} | cn_{L-1}].
       Gate column order is [i | f | o | g] (pre-permuted in the wrapper)."""
    H = hidden_size
    S = seq_len
    B = batch
    V = emb_ref.shape[0]
    w_refs = refs[:3 * num_layers]
    out_ref = refs[3 * num_layers]

    # In-kernel embedding lookup as a one-hot MXU matmul (exact: rows weighted by 0/1).
    ids = ids_ref[...]                                               # (S*B, 1) i32
    vocab = jax.lax.broadcasted_iota(jnp.int32, (S * B, V), 1)
    one_hot = (vocab == ids).astype(jnp.float32)                     # (S*B, V)
    inp = jnp.dot(one_hot, emb_ref[...],
                  preferred_element_type=jnp.float32)                # (S*B, E)

    finals = []
    hs = []
    for l in range(num_layers):
        w_ih = w_refs[3 * l][...]        # (Din, 4H)
        w_hh = w_refs[3 * l + 1][...]    # (H, 4H)
        bias = w_refs[3 * l + 2][...]    # (1, 4H)

        # Input projection for ALL timesteps in one MXU matmul (off the serial h-chain).
        gx = jnp.dot(inp, w_ih, preferred_element_type=jnp.float32) + bias   # (S*B, 4H)

        h = jnp.zeros((B, H), jnp.float32)
        c = jnp.zeros((B, H), jnp.float32)
        hs = []
        for t in range(S):               # static unroll (small S); B==8 => aligned slices
            gates = gx[t * B:(t + 1) * B, :] + jnp.dot(
                h, w_hh, preferred_element_type=jnp.float32)         # (B, 4H)
            sg = jax.nn.sigmoid(gates[:, :3 * H])                    # one sigmoid for i,f,o
            g = jnp.tanh(gates[:, 3 * H:])                           # one tanh for g
            c = sg[:, H:2 * H] * c + sg[:, :H] * g
            h = sg[:, 2 * H:] * jnp.tanh(c)
            hs.append(h)

        # Next layer's input: VMEM-resident value, no round trip through the output ref.
        inp = jnp.concatenate(hs, axis=0)                            # (S*B, H)
        finals += [h, c]

    # Single lane-dense, tile-aligned store for the whole kernel.
    out_ref[...] = jnp.concatenate(hs + finals, axis=1)              # (B, (S + 2L)*H)


def encoder_lstm_pallas(ids2d, embedding, packed_layers, seq_len, batch_pad):
    """ids2d: (S*B_pad, 1) i32.  embedding: (V, E) f32.
       packed_layers: list of dicts with w_ih_t (Din,4H), w_hh_t (H,4H), bias (1,4H)."""
    S, B = seq_len, batch_pad
    V, E = embedding.shape
    H = packed_layers[0]["w_hh_t"].shape[0]
    L = len(packed_layers)

    flat_w = []
    in_specs = [pl.BlockSpec((S * B, 1), lambda i: (0, 0)),
                pl.BlockSpec((V, E), lambda i: (0, 0))]
    flops = 2 * S * B * V * E
    transcendentals = 0
    bytes_accessed = 4 * S * B + 4 * V * E + 4 * B * (S + 2 * L) * H
    for layer in packed_layers:
        din = layer["w_ih_t"].shape[0]
        flat_w += [layer["w_ih_t"], layer["w_hh_t"], layer["bias"]]
        in_specs += [pl.BlockSpec((din, 4 * H), lambda i: (0, 0)),
                     pl.BlockSpec((H, 4 * H), lambda i: (0, 0)),
                     pl.BlockSpec((1, 4 * H), lambda i: (0, 0))]
        flops += 2 * S * B * din * 4 * H + 2 * S * B * H * 4 * H
        transcendentals += S * B * 5 * H
        bytes_accessed += 4 * (din * 4 * H + H * 4 * H + 4 * H)

    kernel = functools.partial(_encoder_lstm_kernel, num_layers=L,
                               hidden_size=H, seq_len=S, batch=B)
    slab = pl.pallas_call(
        kernel,
        out_shape=jax.ShapeDtypeStruct((B, (S + 2 * L) * H), jnp.float32),
        grid=(1,),
        in_specs=in_specs,
        out_specs=pl.BlockSpec((B, (S + 2 * L) * H), lambda i: (0, 0)),
        compiler_params=pltpu.CompilerParams(
            dimension_semantics=("arbitrary",)),   # time/layer recurrence is sequential
        cost_estimate=pl.CostEstimate(flops=flops,
                                      transcendentals=transcendentals,
                                      bytes_accessed=bytes_accessed),
    )(ids2d, embedding, *flat_w)
    return slab


# ------------------------------ Encoder forward (wrapper) -------------------------------

def encoder_forward(token_ids, params):
    """classification=True path: embedded = Embedding(input); outputs, (h, c) = LSTM(embedded)."""
    embedding = params["embedding"]
    packed = params["lstm_packed"]
    S, B = token_ids.shape
    H = packed[0]["w_hh_t"].shape[0]
    L = len(packed)

    # Pad batch to the 8-sublane granularity so all in-kernel slices are tile-aligned.
    B_pad = max(8, ((B + 7) // 8) * 8)
    ids_p = jnp.zeros((S, B_pad), jnp.int32).at[:, :B].set(token_ids.astype(jnp.int32))
    ids2d = ids_p.reshape(S * B_pad, 1)

    slab = encoder_lstm_pallas(ids2d, embedding, packed, S, B_pad)   # (B_pad, (S+2L)*H)

    # Decode the lane-dense slab (free XLA slices/reshapes outside the kernel).
    valid = slab[:B]                                                 # (B, (S+2L)*H)
    outputs = valid[:, :S * H].reshape(B, S, H).transpose(1, 0, 2)   # (S, B, H)
    base = S * H
    h_list, c_list = [], []
    for l in range(L):
        h_list.append(valid[:, base + (2 * l) * H: base + (2 * l + 1) * H])
        c_list.append(valid[:, base + (2 * l + 1) * H: base + (2 * l + 2) * H])
    hidden_states = (jnp.stack(h_list), jnp.stack(c_list))           # (L, B, H) each
    return outputs, hidden_states


# ----------------------------- Param initialization / packing ---------------------------

def _pack_lstm_layer(layer, H):
    # PyTorch gate row order is [i | f | g | o]; permute to [i | f | o | g] so the kernel can
    # apply one sigmoid over the first 3H gate columns and one tanh over the last H.
    perm = jnp.concatenate([jnp.arange(0, 2 * H),
                            jnp.arange(3 * H, 4 * H),
                            jnp.arange(2 * H, 3 * H)])
    w_ih = layer["w_ih"][perm]                  # (4H, Din)
    w_hh = layer["w_hh"][perm]                  # (4H, H)
    bias = (layer["b_ih"] + layer["b_hh"])[perm]
    return {"w_ih_t": jnp.transpose(w_ih),                      # (Din, 4H)
            "w_hh_t": jnp.transpose(w_hh),                      # (H, 4H)
            "bias": bias.reshape(1, 4 * H)}                     # (1, 4H)


def init_params(key, num_embedding, embedding_dim, hidden_size, num_layers):
    keys = jax.random.split(key, 1 + 4 * num_layers)
    params = {"embedding": jax.random.normal(
        keys[0], (num_embedding, embedding_dim), jnp.float32)}
    layers = []
    in_dim = embedding_dim
    bound = 1.0 / math.sqrt(hidden_size)  # PyTorch nn.LSTM default uniform(-1/sqrt(H), 1/sqrt(H))
    for l in range(num_layers):
        kk = keys[1 + 4 * l: 1 + 4 * (l + 1)]
        layers.append({
            "w_ih": jax.random.uniform(kk[0], (4 * hidden_size, in_dim), jnp.float32, -bound, bound),
            "w_hh": jax.random.uniform(kk[1], (4 * hidden_size, hidden_size), jnp.float32, -bound, bound),
            "b_ih": jax.random.uniform(kk[2], (4 * hidden_size,), jnp.float32, -bound, bound),
            "b_hh": jax.random.uniform(kk[3], (4 * hidden_size,), jnp.float32, -bound, bound),
        })
        in_dim = hidden_size
    params["lstm"] = layers                                              # canonical PyTorch layout
    params["lstm_packed"] = [_pack_lstm_layer(l, hidden_size) for l in layers]  # kernel layout
    return params


# ------------------------------ Pure-JAX reference (PyTorch semantics) -----------------------------

def encoder_reference(token_ids, params):
    x = jnp.take(params["embedding"], token_ids, axis=0)
    h_list, c_list = [], []
    for layer in params["lstm"]:
        H = layer["w_hh"].shape[1]
        B = x.shape[1]
        w_ih_t = layer["w_ih"].T
        w_hh_t = layer["w_hh"].T
        b = (layer["b_ih"] + layer["b_hh"]).reshape(1, -1)

        def step(carry, x_t, w_ih_t=w_ih_t, w_hh_t=w_hh_t, b=b, H=H):
            h, c = carry
            gates = x_t @ w_ih_t + h @ w_hh_t + b
            i = jax.nn.sigmoid(gates[:, 0 * H:1 * H])
            f = jax.nn.sigmoid(gates[:, 1 * H:2 * H])
            g = jnp.tanh(gates[:, 2 * H:3 * H])
            o = jax.nn.sigmoid(gates[:, 3 * H:4 * H])
            c_new = f * c + i * g
            h_new = o * jnp.tanh(c_new)
            return (h_new, c_new), h_new

        (hn, cn), out = jax.lax.scan(
            step, (jnp.zeros((B, H), jnp.float32), jnp.zeros((B, H), jnp.float32)), x)
        x = out
        h_list.append(hn)
        c_list.append(cn)
    return x, (jnp.stack(h_list), jnp.stack(c_list))


# ------------------------------------ Main -------------------------------------

if __name__ == "__main__":
    # Encoder(batch_size=2, input_size=32, hidden_size=32, num_layers=2,
    #         num_embedding=16, embedding_dim=32, classification=True, rnn=nn.LSTM)
    seq_len, batch = 8, 2
    num_embedding, embedding_dim = 16, 32
    hidden_size, num_layers = 32, 2

    key = jax.random.PRNGKey(0)
    k_params, k_ids = jax.random.split(key)
    params = init_params(k_params, num_embedding, embedding_dim, hidden_size, num_layers)
    token_ids = jax.random.randint(k_ids, (seq_len, batch), 0, num_embedding, dtype=jnp.int32)

    outputs, (h_n, c_n) = encoder_forward(token_ids, params)
    outputs = jax.block_until_ready(outputs)
    h_n = jax.block_until_ready(h_n)
    c_n = jax.block_until_ready(c_n)

    ref_out, (ref_h, ref_c) = encoder_reference(token_ids, params)
    assert outputs.shape == (seq_len, batch, hidden_size)
    assert h_n.shape == (num_layers, batch, hidden_size)
    assert c_n.shape == (num_layers, batch, hidden_size)
    assert jnp.allclose(outputs, ref_out, atol=1e-5, rtol=1e-5)
    assert jnp.allclose(h_n, ref_h, atol=1e-5, rtol=1e-5)
    assert jnp.allclose(c_n, ref_c, atol=1e-5, rtol=1e-5)

    print("KERNEL_OK")
</pallas_src>

<mosaic_0001>
module attributes {stable_mosaic.version = 11 : i64} {
  func.func @_encoder_lstm_kernel(%arg0: i32, %arg1: memref<64x1xi32, #tpu.memory_space<vmem>>, %arg2: memref<16x32xf32, #tpu.memory_space<vmem>>, %arg3: memref<32x128xf32, #tpu.memory_space<vmem>>, %arg4: memref<32x128xf32, #tpu.memory_space<vmem>>, %arg5: memref<1x128xf32, #tpu.memory_space<vmem>>, %arg6: memref<32x128xf32, #tpu.memory_space<vmem>>, %arg7: memref<32x128xf32, #tpu.memory_space<vmem>>, %arg8: memref<1x128xf32, #tpu.memory_space<vmem>>, %arg9: memref<8x384xf32, #tpu.memory_space<vmem>>) attributes {dimension_semantics = [#tpu.dimension_semantics<arbitrary>], iteration_bounds = array<i64: 1>, scalar_prefetch = 0 : i64, scratch_operands = 0 : i64, tpu.core_type = #tpu.core_type<tc>, window_params = [{pipeline_mode = #tpu.pipeline_mode<synchronous>, transform_indices = @transform_0, window_bounds = array<i64: 64, 1>}, {pipeline_mode = #tpu.pipeline_mode<synchronous>, transform_indices = @transform_1, window_bounds = array<i64: 16, 32>}, {pipeline_mode = #tpu.pipeline_mode<synchronous>, transform_indices = @transform_2, window_bounds = array<i64: 32, 128>}, {pipeline_mode = #tpu.pipeline_mode<synchronous>, transform_indices = @transform_3, window_bounds = array<i64: 32, 128>}, {pipeline_mode = #tpu.pipeline_mode<synchronous>, transform_indices = @transform_4, window_bounds = array<i64: 1, 128>}, {pipeline_mode = #tpu.pipeline_mode<synchronous>, transform_indices = @transform_5, window_bounds = array<i64: 32, 128>}, {pipeline_mode = #tpu.pipeline_mode<synchronous>, transform_indices = @transform_6, window_bounds = array<i64: 32, 128>}, {pipeline_mode = #tpu.pipeline_mode<synchronous>, transform_indices = @transform_7, window_bounds = array<i64: 1, 128>}, {pipeline_mode = #tpu.pipeline_mode<synchronous>, transform_indices = @transform_8, window_bounds = array<i64: 8, 384>}]} {
    %c0 = arith.constant 0 : index
    %c0_0 = arith.constant 0 : index
    %0 = vector.load %arg1[%c0, %c0_0] : memref<64x1xi32, #tpu.memory_space<vmem>>, vector<64x1xi32>
    %1 = tpu.iota {dimensions = array<i32: 1>} : vector<64x16xi32>
    %2 = vector.broadcast %0 : vector<64x1xi32> to vector<64x16xi32>
    %3 = arith.cmpi eq, %1, %2 : vector<64x16xi32>
    %4 = arith.extui %3 : vector<64x16xi1> to vector<64x16xi32>
    %5 = arith.sitofp %4 : vector<64x16xi32> to vector<64x16xf32>
    %c0_1 = arith.constant 0 : index
    %c0_2 = arith.constant 0 : index
    %6 = vector.load %arg2[%c0_1, %c0_2] : memref<16x32xf32, #tpu.memory_space<vmem>>, vector<16x32xf32>
    %cst = arith.constant dense<0.000000e+00> : vector<64x32xf32>
    %7 = tpu.matmul %5, %6, %cst {dimension_numbers = #tpu.dot_dimension_numbers<[1], [0], [0], [1], [0, 0, 1, 1], [], []>} : vector<64x16xf32>, vector<16x32xf32>, vector<64x32xf32> -> vector<64x32xf32>
    %c0_3 = arith.constant 0 : index
    %c0_4 = arith.constant 0 : index
    %8 = vector.load %arg3[%c0_3, %c0_4] : memref<32x128xf32, #tpu.memory_space<vmem>>, vector<32x128xf32>
    %c0_5 = arith.constant 0 : index
    %c0_6 = arith.constant 0 : index
    %9 = vector.load %arg4[%c0_5, %c0_6] : memref<32x128xf32, #tpu.memory_space<vmem>>, vector<32x128xf32>
    %c0_7 = arith.constant 0 : index
    %c0_8 = arith.constant 0 : index
    %10 = vector.load %arg5[%c0_7, %c0_8] : memref<1x128xf32, #tpu.memory_space<vmem>>, vector<1x128xf32>
    %cst_9 = arith.constant dense<0.000000e+00> : vector<64x128xf32>
    %11 = tpu.matmul %7, %8, %cst_9 {dimension_numbers = #tpu.dot_dimension_numbers<[1], [0], [0], [1], [0, 0, 1, 1], [], []>} : vector<64x32xf32>, vector<32x128xf32>, vector<64x128xf32> -> vector<64x128xf32>
    %12 = vector.broadcast %10 : vector<1x128xf32> to vector<64x128xf32>
    %13 = arith.addf %11, %12 : vector<64x128xf32>
    %cst_10 = arith.constant 0.000000e+00 : f32
    %14 = vector.broadcast %cst_10 : f32 to vector<8x32xf32>
    %cst_11 = arith.constant 0.000000e+00 : f32
    %15 = vector.broadcast %cst_11 : f32 to vector<8x32xf32>
    %16 = vector.extract_strided_slice %13 {offsets = [0, 0], sizes = [8, 128], strides = [1, 1]} : vector<64x128xf32> to vector<8x128xf32>
    %cst_12 = arith.constant dense<0.000000e+00> : vector<8x128xf32>
    %17 = tpu.matmul %14, %9, %cst_12 {dimension_numbers = #tpu.dot_dimension_numbers<[1], [0], [0], [1], [0, 0, 1, 1], [], []>} : vector<8x32xf32>, vector<32x128xf32>, vector<8x128xf32> -> vector<8x128xf32>
    %18 = arith.addf %16, %17 : vector<8x128xf32>
    %19 = vector.extract_strided_slice %18 {offsets = [0, 0], sizes = [8, 96], strides = [1, 1]} : vector<8x128xf32> to vector<8x96xf32>
    %20 = arith.negf %19 : vector<8x96xf32>
    %21 = math.exp %20 : vector<8x96xf32>
    %cst_13 = arith.constant 1.000000e+00 : f32
    %22 = vector.broadcast %cst_13 : f32 to vector<8x96xf32>
    %23 = arith.addf %22, %21 : vector<8x96xf32>
    %24 = arith.divf %22, %23 : vector<8x96xf32>
    %25 = vector.extract_strided_slice %18 {offsets = [0, 96], sizes = [8, 32], strides = [1, 1]} : vector<8x128xf32> to vector<8x32xf32>
    %26 = math.tanh %25 : vector<8x32xf32>
    %27 = vector.extract_strided_slice %24 {offsets = [0, 32], sizes = [8, 32], strides = [1, 1]} : vector<8x96xf32> to vector<8x32xf32>
    %28 = arith.mulf %27, %15 : vector<8x32xf32>
    %29 = vector.extract_strided_slice %24 {offsets = [0, 0], sizes = [8, 32], strides = [1, 1]} : vector<8x96xf32> to vector<8x32xf32>
    %30 = arith.mulf %29, %26 : vector<8x32xf32>
    %31 = arith.addf %28, %30 : vector<8x32xf32>
    %32 = vector.extract_strided_slice %24 {offsets = [0, 64], sizes = [8, 32], strides = [1, 1]} : vector<8x96xf32> to vector<8x32xf32>
    %33 = math.tanh %31 : vector<8x32xf32>
    %34 = arith.mulf %32, %33 : vector<8x32xf32>
    %35 = vector.extract_strided_slice %13 {offsets = [8, 0], sizes = [8, 128], strides = [1, 1]} : vector<64x128xf32> to vector<8x128xf32>
    %cst_14 = arith.constant dense<0.000000e+00> : vector<8x128xf32>
    %36 = tpu.matmul %34, %9, %cst_14 {dimension_numbers = #tpu.dot_dimension_numbers<[1], [0], [0], [1], [0, 0, 1, 1], [], []>} : vector<8x32xf32>, vector<32x128xf32>, vector<8x128xf32> -> vector<8x128xf32>
    %37 = arith.addf %35, %36 : vector<8x128xf32>
    %38 = vector.extract_strided_slice %37 {offsets = [0, 0], sizes = [8, 96], strides = [1, 1]} : vector<8x128xf32> to vector<8x96xf32>
    %39 = arith.negf %38 : vector<8x96xf32>
    %40 = math.exp %39 : vector<8x96xf32>
    %cst_15 = arith.constant 1.000000e+00 : f32
    %41 = vector.broadcast %cst_15 : f32 to vector<8x96xf32>
    %42 = arith.addf %41, %40 : vector<8x96xf32>
    %43 = arith.divf %41, %42 : vector<8x96xf32>
    %44 = vector.extract_strided_slice %37 {offsets = [0, 96], sizes = [8, 32], strides = [1, 1]} : vector<8x128xf32> to vector<8x32xf32>
    %45 = math.tanh %44 : vector<8x32xf32>
    %46 = vector.extract_strided_slice %43 {offsets = [0, 32], sizes = [8, 32], strides = [1, 1]} : vector<8x96xf32> to vector<8x32xf32>
    %47 = arith.mulf %46, %31 : vector<8x32xf32>
    %48 = vector.extract_strided_slice %43 {offsets = [0, 0], sizes = [8, 32], strides = [1, 1]} : vector<8x96xf32> to vector<8x32xf32>
    %49 = arith.mulf %48, %45 : vector<8x32xf32>
    %50 = arith.addf %47, %49 : vector<8x32xf32>
    %51 = vector.extract_strided_slice %43 {offsets = [0, 64], sizes = [8, 32], strides = [1, 1]} : vector<8x96xf32> to vector<8x32xf32>
    %52 = math.tanh %50 : vector<8x32xf32>
    %53 = arith.mulf %51, %52 : vector<8x32xf32>
    %54 = vector.extract_strided_slice %13 {offsets = [16, 0], sizes = [8, 128], strides = [1, 1]} : vector<64x128xf32> to vector<8x128xf32>
    %cst_16 = arith.constant dense<0.000000e+00> : vector<8x128xf32>
    %55 = tpu.matmul %53, %9, %cst_16 {dimension_numbers = #tpu.dot_dimension_numbers<[1], [0], [0], [1], [0, 0, 1, 1], [], []>} : vector<8x32xf32>, vector<32x128xf32>, vector<8x128xf32> -> vector<8x128xf32>
    %56 = arith.addf %54, %55 : vector<8x128xf32>
    %57 = vector.extract_strided_slice %56 {offsets = [0, 0], sizes = [8, 96], strides = [1, 1]} : vector<8x128xf32> to vector<8x96xf32>
    %58 = arith.negf %57 : vector<8x96xf32>
    %59 = math.exp %58 : vector<8x96xf32>
    %cst_17 = arith.constant 1.000000e+00 : f32
    %60 = vector.broadcast %cst_17 : f32 to vector<8x96xf32>
    %61 = arith.addf %60, %59 : vector<8x96xf32>
    %62 = arith.divf %60, %61 : vector<8x96xf32>
    %63 = vector.extract_strided_slice %56 {offsets = [0, 96], sizes = [8, 32], strides = [1, 1]} : vector<8x128xf32> to vector<8x32xf32>
    %64 = math.tanh %63 : vector<8x32xf32>
    %65 = vector.extract_strided_slice %62 {offsets = [0, 32], sizes = [8, 32], strides = [1, 1]} : vector<8x96xf32> to vector<8x32xf32>
    %66 = arith.mulf %65, %50 : vector<8x32xf32>
    %67 = vector.extract_strided_slice %62 {offsets = [0, 0], sizes = [8, 32], strides = [1, 1]} : vector<8x96xf32> to vector<8x32xf32>
    %68 = arith.mulf %67, %64 : vector<8x32xf32>
    %69 = arith.addf %66, %68 : vector<8x32xf32>
    %70 = vector.extract_strided_slice %62 {offsets = [0, 64], sizes = [8, 32], strides = [1, 1]} : vector<8x96xf32> to vector<8x32xf32>
    %71 = math.tanh %69 : vector<8x32xf32>
    %72 = arith.mulf %70, %71 : vector<8x32xf32>
    %73 = vector.extract_strided_slice %13 {offsets = [24, 0], sizes = [8, 128], strides = [1, 1]} : vector<64x128xf32> to vector<8x128xf32>
    %cst_18 = arith.constant dense<0.000000e+00> : vector<8x128xf32>
    %74 = tpu.matmul %72, %9, %cst_18 {dimension_numbers = #tpu.dot_dimension_numbers<[1], [0], [0], [1], [0, 0, 1, 1], [], []>} : vector<8x32xf32>, vector<32x128xf32>, vector<8x128xf32> -> vector<8x128xf32>
    %75 = arith.addf %73, %74 : vector<8x128xf32>
    %76 = vector.extract_strided_slice %75 {offsets = [0, 0], sizes = [8, 96], strides = [1, 1]} : vector<8x128xf32> to vector<8x96xf32>
    %77 = arith.negf %76 : vector<8x96xf32>
    %78 = math.exp %77 : vector<8x96xf32>
    %cst_19 = arith.constant 1.000000e+00 : f32
    %79 = vector.broadcast %cst_19 : f32 to vector<8x96xf32>
    %80 = arith.addf %79, %78 : vector<8x96xf32>
    %81 = arith.divf %79, %80 : vector<8x96xf32>
    %82 = vector.extract_strided_slice %75 {offsets = [0, 96], sizes = [8, 32], strides = [1, 1]} : vector<8x128xf32> to vector<8x32xf32>
    %83 = math.tanh %82 : vector<8x32xf32>
    %84 = vector.extract_strided_slice %81 {offsets = [0, 32], sizes = [8, 32], strides = [1, 1]} : vector<8x96xf32> to vector<8x32xf32>
    %85 = arith.mulf %84, %69 : vector<8x32xf32>
    %86 = vector.extract_strided_slice %81 {offsets = [0, 0], sizes = [8, 32], strides = [1, 1]} : vector<8x96xf32> to vector<8x32xf32>
    %87 = arith.mulf %86, %83 : vector<8x32xf32>
    %88 = arith.addf %85, %87 : vector<8x32xf32>
    %89 = vector.extract_strided_slice %81 {offsets = [0, 64], sizes = [8, 32], strides = [1, 1]} : vector<8x96xf32> to vector<8x32xf32>
    %90 = math.tanh %88 : vector<8x32xf32>
    %91 = arith.mulf %89, %90 : vector<8x32xf32>
    %92 = vector.extract_strided_slice %13 {offsets = [32, 0], sizes = [8, 128], strides = [1, 1]} : vector<64x128xf32> to vector<8x128xf32>
    %cst_20 = arith.constant dense<0.000000e+00> : vector<8x128xf32>
    %93 = tpu.matmul %91, %9, %cst_20 {dimension_numbers = #tpu.dot_dimension_numbers<[1], [0], [0], [1], [0, 0, 1, 1], [], []>} : vector<8x32xf32>, vector<32x128xf32>, vector<8x128xf32> -> vector<8x128xf32>
    %94 = arith.addf %92, %93 : vector<8x128xf32>
    %95 = vector.extract_strided_slice %94 {offsets = [0, 0], sizes = [8, 96], strides = [1, 1]} : vector<8x128xf32> to vector<8x96xf32>
    %96 = arith.negf %95 : vector<8x96xf32>
    %97 = math.exp %96 : vector<8x96xf32>
    %cst_21 = arith.constant 1.000000e+00 : f32
    %98 = vector.broadcast %cst_21 : f32 to vector<8x96xf32>
    %99 = arith.addf %98, %97 : vector<8x96xf32>
    %100 = arith.divf %98, %99 : vector<8x96xf32>
    %101 = vector.extract_strided_slice %94 {offsets = [0, 96], sizes = [8, 32], strides = [1, 1]} : vector<8x128xf32> to vector<8x32xf32>
    %102 = math.tanh %101 : vector<8x32xf32>
    %103 = vector.extract_strided_slice %100 {offsets = [0, 32], sizes = [8, 32], strides = [1, 1]} : vector<8x96xf32> to vector<8x32xf32>
    %104 = arith.mulf %103, %88 : vector<8x32xf32>
    %105 = vector.extract_strided_slice %100 {offsets = [0, 0], sizes = [8, 32], strides = [1, 1]} : vector<8x96xf32> to vector<8x32xf32>
    %106 = arith.mulf %105, %102 : vector<8x32xf32>
    %107 = arith.addf %104, %106 : vector<8x32xf32>
    %108 = vector.extract_strided_slice %100 {offsets = [0, 64], sizes = [8, 32], strides = [1, 1]} : vector<8x96xf32> to vector<8x32xf32>
    %109 = math.tanh %107 : vector<8x32xf32>
    %110 = arith.mulf %108, %109 : vector<8x32xf32>
    %111 = vector.extract_strided_slice %13 {offsets = [40, 0], sizes = [8, 128], strides = [1, 1]} : vector<64x128xf32> to vector<8x128xf32>
    %cst_22 = arith.constant dense<0.000000e+00> : vector<8x128xf32>
    %112 = tpu.matmul %110, %9, %cst_22 {dimension_numbers = #tpu.dot_dimension_numbers<[1], [0], [0], [1], [0, 0, 1, 1], [], []>} : vector<8x32xf32>, vector<32x128xf32>, vector<8x128xf32> -> vector<8x128xf32>
    %113 = arith.addf %111, %112 : vector<8x128xf32>
    %114 = vector.extract_strided_slice %113 {offsets = [0, 0], sizes = [8, 96], strides = [1, 1]} : vector<8x128xf32> to vector<8x96xf32>
    %115 = arith.negf %114 : vector<8x96xf32>
    %116 = math.exp %115 : vector<8x96xf32>
    %cst_23 = arith.constant 1.000000e+00 : f32
    %117 = vector.broadcast %cst_23 : f32 to vector<8x96xf32>
    %118 = arith.addf %117, %116 : vector<8x96xf32>
    %119 = arith.divf %117, %118 : vector<8x96xf32>
    %120 = vector.extract_strided_slice %113 {offsets = [0, 96], sizes = [8, 32], strides = [1, 1]} : vector<8x128xf32> to vector<8x32xf32>
    %121 = math.tanh %120 : vector<8x32xf32>
    %122 = vector.extract_strided_slice %119 {offsets = [0, 32], sizes = [8, 32], strides = [1, 1]} : vector<8x96xf32> to vector<8x32xf32>
    %123 = arith.mulf %122, %107 : vector<8x32xf32>
    %124 = vector.extract_strided_slice %119 {offsets = [0, 0], sizes = [8, 32], strides = [1, 1]} : vector<8x96xf32> to vector<8x32xf32>
    %125 = arith.mulf %124, %121 : vector<8x32xf32>
    %126 = arith.addf %123, %125 : vector<8x32xf32>
    %127 = vector.extract_strided_slice %119 {offsets = [0, 64], sizes = [8, 32], strides = [1, 1]} : vector<8x96xf32> to vector<8x32xf32>
    %128 = math.tanh %126 : vector<8x32xf32>
    %129 = arith.mulf %127, %128 : vector<8x32xf32>
    %130 = vector.extract_strided_slice %13 {offsets = [48, 0], sizes = [8, 128], strides = [1, 1]} : vector<64x128xf32> to vector<8x128xf32>
    %cst_24 = arith.constant dense<0.000000e+00> : vector<8x128xf32>
    %131 = tpu.matmul %129, %9, %cst_24 {dimension_numbers = #tpu.dot_dimension_numbers<[1], [0], [0], [1], [0, 0, 1, 1], [], []>} : vector<8x32xf32>, vector<32x128xf32>, vector<8x128xf32> -> vector<8x128xf32>
    %132 = arith.addf %130, %131 : vector<8x128xf32>
    %133 = vector.extract_strided_slice %132 {offsets = [0, 0], sizes = [8, 96], strides = [1, 1]} : vector<8x128xf32> to vector<8x96xf32>
    %134 = arith.negf %133 : vector<8x96xf32>
    %135 = math.exp %134 : vector<8x96xf32>
    %cst_25 = arith.constant 1.000000e+00 : f32
    %136 = vector.broadcast %cst_25 : f32 to vector<8x96xf32>
    %137 = arith.addf %136, %135 : vector<8x96xf32>
    %138 = arith.divf %136, %137 : vector<8x96xf32>
    %139 = vector.extract_strided_slice %132 {offsets = [0, 96], sizes = [8, 32], strides = [1, 1]} : vector<8x128xf32> to vector<8x32xf32>
    %140 = math.tanh %139 : vector<8x32xf32>
    %141 = vector.extract_strided_slice %138 {offsets = [0, 32], sizes = [8, 32], strides = [1, 1]} : vector<8x96xf32> to vector<8x32xf32>
    %142 = arith.mulf %141, %126 : vector<8x32xf32>
    %143 = vector.extract_strided_slice %138 {offsets = [0, 0], sizes = [8, 32], strides = [1, 1]} : vector<8x96xf32> to vector<8x32xf32>
    %144 = arith.mulf %143, %140 : vector<8x32xf32>
    %145 = arith.addf %142, %144 : vector<8x32xf32>
    %146 = vector.extract_strided_slice %138 {offsets = [0, 64], sizes = [8, 32], strides = [1, 1]} : vector<8x96xf32> to vector<8x32xf32>
    %147 = math.tanh %145 : vector<8x32xf32>
    %148 = arith.mulf %146, %147 : vector<8x32xf32>
    %149 = vector.extract_strided_slice %13 {offsets = [56, 0], sizes = [8, 128], strides = [1, 1]} : vector<64x128xf32> to vector<8x128xf32>
    %cst_26 = arith.constant dense<0.000000e+00> : vector<8x128xf32>
    %150 = tpu.matmul %148, %9, %cst_26 {dimension_numbers = #tpu.dot_dimension_numbers<[1], [0], [0], [1], [0, 0, 1, 1], [], []>} : vector<8x32xf32>, vector<32x128xf32>, vector<8x128xf32> -> vector<8x128xf32>
    %151 = arith.addf %149, %150 : vector<8x128xf32>
    %152 = vector.extract_strided_slice %151 {offsets = [0, 0], sizes = [8, 96], strides = [1, 1]} : vector<8x128xf32> to vector<8x96xf32>
    %153 = arith.negf %152 : vector<8x96xf32>
    %154 = math.exp %153 : vector<8x96xf32>
    %cst_27 = arith.constant 1.000000e+00 : f32
    %155 = vector.broadcast %cst_27 : f32 to vector<8x96xf32>
    %156 = arith.addf %155, %154 : vector<8x96xf32>
    %157 = arith.divf %155, %156 : vector<8x96xf32>
    %158 = vector.extract_strided_slice %151 {offsets = [0, 96], sizes = [8, 32], strides = [1, 1]} : vector<8x128xf32> to vector<8x32xf32>
    %159 = math.tanh %158 : vector<8x32xf32>
    %160 = vector.extract_strided_slice %157 {offsets = [0, 32], sizes = [8, 32], strides = [1, 1]} : vector<8x96xf32> to vector<8x32xf32>
    %161 = arith.mulf %160, %145 : vector<8x32xf32>
    %162 = vector.extract_strided_slice %157 {offsets = [0, 0], sizes = [8, 32], strides = [1, 1]} : vector<8x96xf32> to vector<8x32xf32>
    %163 = arith.mulf %162, %159 : vector<8x32xf32>
    %164 = arith.addf %161, %163 : vector<8x32xf32>
    %165 = vector.extract_strided_slice %157 {offsets = [0, 64], sizes = [8, 32], strides = [1, 1]} : vector<8x96xf32> to vector<8x32xf32>
    %166 = math.tanh %164 : vector<8x32xf32>
    %167 = arith.mulf %165, %166 : vector<8x32xf32>
    %168 = tpu.concatenate %34, %53, %72, %91, %110, %129, %148, %167 in 0 : vector<8x32xf32>, vector<8x32xf32>, vector<8x32xf32>, vector<8x32xf32>, vector<8x32xf32>, vector<8x32xf32>, vector<8x32xf32>, vector<8x32xf32> -> vector<64x32xf32>
    %c0_28 = arith.constant 0 : index
    %c0_29 = arith.constant 0 : index
    %169 = vector.load %arg6[%c0_28, %c0_29] : memref<32x128xf32, #tpu.memory_space<vmem>>, vector<32x128xf32>
    %c0_30 = arith.constant 0 : index
    %c0_31 = arith.constant 0 : index
    %170 = vector.load %arg7[%c0_30, %c0_31] : memref<32x128xf32, #tpu.memory_space<vmem>>, vector<32x128xf32>
    %c0_32 = arith.constant 0 : index
    %c0_33 = arith.constant 0 : index
    %171 = vector.load %arg8[%c0_32, %c0_33] : memref<1x128xf32, #tpu.memory_space<vmem>>, vector<1x128xf32>
    %cst_34 = arith.constant dense<0.000000e+00> : vector<64x128xf32>
    %172 = tpu.matmul %168, %169, %cst_34 {dimension_numbers = #tpu.dot_dimension_numbers<[1], [0], [0], [1], [0, 0, 1, 1], [], []>} : vector<64x32xf32>, vector<32x128xf32>, vector<64x128xf32> -> vector<64x128xf32>
    %173 = vector.broadcast %171 : vector<1x128xf32> to vector<64x128xf32>
    %174 = arith.addf %172, %173 : vector<64x128xf32>
    %cst_35 = arith.constant 0.000000e+00 : f32
    %175 = vector.broadcast %cst_35 : f32 to vector<8x32xf32>
    %cst_36 = arith.constant 0.000000e+00 : f32
    %176 = vector.broadcast %cst_36 : f32 to vector<8x32xf32>
    %177 = vector.extract_strided_slice %174 {offsets = [0, 0], sizes = [8, 128], strides = [1, 1]} : vector<64x128xf32> to vector<8x128xf32>
    %cst_37 = arith.constant dense<0.000000e+00> : vector<8x128xf32>
    %178 = tpu.matmul %175, %170, %cst_37 {dimension_numbers = #tpu.dot_dimension_numbers<[1], [0], [0], [1], [0, 0, 1, 1], [], []>} : vector<8x32xf32>, vector<32x128xf32>, vector<8x128xf32> -> vector<8x128xf32>
    %179 = arith.addf %177, %178 : vector<8x128xf32>
    %180 = vector.extract_strided_slice %179 {offsets = [0, 0], sizes = [8, 96], strides = [1, 1]} : vector<8x128xf32> to vector<8x96xf32>
    %181 = arith.negf %180 : vector<8x96xf32>
    %182 = math.exp %181 : vector<8x96xf32>
    %cst_38 = arith.constant 1.000000e+00 : f32
    %183 = vector.broadcast %cst_38 : f32 to vector<8x96xf32>
    %184 = arith.addf %183, %182 : vector<8x96xf32>
    %185 = arith.divf %183, %184 : vector<8x96xf32>
    %186 = vector.extract_strided_slice %179 {offsets = [0, 96], sizes = [8, 32], strides = [1, 1]} : vector<8x128xf32> to vector<8x32xf32>
    %187 = math.tanh %186 : vector<8x32xf32>
    %188 = vector.extract_strided_slice %185 {offsets = [0, 32], sizes = [8, 32], strides = [1, 1]} : vector<8x96xf32> to vector<8x32xf32>
    %189 = arith.mulf %188, %176 : vector<8x32xf32>
    %190 = vector.extract_strided_slice %185 {offsets = [0, 0], sizes = [8, 32], strides = [1, 1]} : vector<8x96xf32> to vector<8x32xf32>
    %191 = arith.mulf %190, %187 : vector<8x32xf32>
    %192 = arith.addf %189, %191 : vector<8x32xf32>
    %193 = vector.extract_strided_slice %185 {offsets = [0, 64], sizes = [8, 32], strides = [1, 1]} : vector<8x96xf32> to vector<8x32xf32>
    %194 = math.tanh %192 : vector<8x32xf32>
    %195 = arith.mulf %193, %194 : vector<8x32xf32>
    %196 = vector.extract_strided_slice %174 {offsets = [8, 0], sizes = [8, 128], strides = [1, 1]} : vector<64x128xf32> to vector<8x128xf32>
    %cst_39 = arith.constant dense<0.000000e+00> : vector<8x128xf32>
    %197 = tpu.matmul %195, %170, %cst_39 {dimension_numbers = #tpu.dot_dimension_numbers<[1], [0], [0], [1], [0, 0, 1, 1], [], []>} : vector<8x32xf32>, vector<32x128xf32>, vector<8x128xf32> -> vector<8x128xf32>
    %198 = arith.addf %196, %197 : vector<8x128xf32>
    %199 = vector.extract_strided_slice %198 {offsets = [0, 0], sizes = [8, 96], strides = [1, 1]} : vector<8x128xf32> to vector<8x96xf32>
    %200 = arith.negf %199 : vector<8x96xf32>
    %201 = math.exp %200 : vector<8x96xf32>
    %cst_40 = arith.constant 1.000000e+00 : f32
    %202 = vector.broadcast %cst_40 : f32 to vector<8x96xf32>
    %203 = arith.addf %202, %201 : vector<8x96xf32>
    %204 = arith.divf %202, %203 : vector<8x96xf32>
    %205 = vector.extract_strided_slice %198 {offsets = [0, 96], sizes = [8, 32], strides = [1, 1]} : vector<8x128xf32> to vector<8x32xf32>
    %206 = math.tanh %205 : vector<8x32xf32>
    %207 = vector.extract_strided_slice %204 {offsets = [0, 32], sizes = [8, 32], strides = [1, 1]} : vector<8x96xf32> to vector<8x32xf32>
    %208 = arith.mulf %207, %192 : vector<8x32xf32>
    %209 = vector.extract_strided_slice %204 {offsets = [0, 0], sizes = [8, 32], strides = [1, 1]} : vector<8x96xf32> to vector<8x32xf32>
    %210 = arith.mulf %209, %206 : vector<8x32xf32>
    %211 = arith.addf %208, %210 : vector<8x32xf32>
    %212 = vector.extract_strided_slice %204 {offsets = [0, 64], sizes = [8, 32], strides = [1, 1]} : vector<8x96xf32> to vector<8x32xf32>
    %213 = math.tanh %211 : vector<8x32xf32>
    %214 = arith.mulf %212, %213 : vector<8x32xf32>
    %215 = vector.extract_strided_slice %174 {offsets = [16, 0], sizes = [8, 128], strides = [1, 1]} : vector<64x128xf32> to vector<8x128xf32>
    %cst_41 = arith.constant dense<0.000000e+00> : vector<8x128xf32>
    %216 = tpu.matmul %214, %170, %cst_41 {dimension_numbers = #tpu.dot_dimension_numbers<[1], [0], [0], [1], [0, 0, 1, 1], [], []>} : vector<8x32xf32>, vector<32x128xf32>, vector<8x128xf32> -> vector<8x128xf32>
    %217 = arith.addf %215, %216 : vector<8x128xf32>
    %218 = vector.extract_strided_slice %217 {offsets = [0, 0], sizes = [8, 96], strides = [1, 1]} : vector<8x128xf32> to vector<8x96xf32>
    %219 = arith.negf %218 : vector<8x96xf32>
    %220 = math.exp %219 : vector<8x96xf32>
    %cst_42 = arith.constant 1.000000e+00 : f32
    %221 = vector.broadcast %cst_42 : f32 to vector<8x96xf32>
    %222 = arith.addf %221, %220 : vector<8x96xf32>
    %223 = arith.divf %221, %222 : vector<8x96xf32>
    %224 = vector.extract_strided_slice %217 {offsets = [0, 96], sizes = [8, 32], strides = [1, 1]} : vector<8x128xf32> to vector<8x32xf32>
    %225 = math.tanh %224 : vector<8x32xf32>
    %226 = vector.extract_strided_slice %223 {offsets = [0, 32], sizes = [8, 32], strides = [1, 1]} : vector<8x96xf32> to vector<8x32xf32>
    %227 = arith.mulf %226, %211 : vector<8x32xf32>
    %228 = vector.extract_strided_slice %223 {offsets = [0, 0], sizes = [8, 32], strides = [1, 1]} : vector<8x96xf32> to vector<8x32xf32>
    %229 = arith.mulf %228, %225 : vector<8x32xf32>
    %230 = arith.addf %227, %229 : vector<8x32xf32>
    %231 = vector.extract_strided_slice %223 {offsets = [0, 64], sizes = [8, 32], strides = [1, 1]} : vector<8x96xf32> to vector<8x32xf32>
    %232 = math.tanh %230 : vector<8x32xf32>
    %233 = arith.mulf %231, %232 : vector<8x32xf32>
    %234 = vector.extract_strided_slice %174 {offsets = [24, 0], sizes = [8, 128], strides = [1, 1]} : vector<64x128xf32> to vector<8x128xf32>
    %cst_43 = arith.constant dense<0.000000e+00> : vector<8x128xf32>
    %235 = tpu.matmul %233, %170, %cst_43 {dimension_numbers = #tpu.dot_dimension_numbers<[1], [0], [0], [1], [0, 0, 1, 1], [], []>} : vector<8x32xf32>, vector<32x128xf32>, vector<8x128xf32> -> vector<8x128xf32>
    %236 = arith.addf %234, %235 : vector<8x128xf32>
    %237 = vector.extract_strided_slice %236 {offsets = [0, 0], sizes = [8, 96], strides = [1, 1]} : vector<8x128xf32> to vector<8x96xf32>
    %238 = arith.negf %237 : vector<8x96xf32>
    %239 = math.exp %238 : vector<8x96xf32>
    %cst_44 = arith.constant 1.000000e+00 : f32
    %240 = vector.broadcast %cst_44 : f32 to vector<8x96xf32>
    %241 = arith.addf %240, %239 : vector<8x96xf32>
    %242 = arith.divf %240, %241 : vector<8x96xf32>
    %243 = vector.extract_strided_slice %236 {offsets = [0, 96], sizes = [8, 32], strides = [1, 1]} : vector<8x128xf32> to vector<8x32xf32>
    %244 = math.tanh %243 : vector<8x32xf32>
    %245 = vector.extract_strided_slice %242 {offsets = [0, 32], sizes = [8, 32], strides = [1, 1]} : vector<8x96xf32> to vector<8x32xf32>
    %246 = arith.mulf %245, %230 : vector<8x32xf32>
    %247 = vector.extract_strided_slice %242 {offsets = [0, 0], sizes = [8, 32], strides = [1, 1]} : vector<8x96xf32> to vector<8x32xf32>
    %248 = arith.mulf %247, %244 : vector<8x32xf32>
    %249 = arith.addf %246, %248 : vector<8x32xf32>
    %250 = vector.extract_strided_slice %242 {offsets = [0, 64], sizes = [8, 32], strides = [1, 1]} : vector<8x96xf32> to vector<8x32xf32>
    %251 = math.tanh %249 : vector<8x32xf32>
    %252 = arith.mulf %250, %251 : vector<8x32xf32>
    %253 = vector.extract_strided_slice %174 {offsets = [32, 0], sizes = [8, 128], strides = [1, 1]} : vector<64x128xf32> to vector<8x128xf32>
    %cst_45 = arith.constant dense<0.000000e+00> : vector<8x128xf32>
    %254 = tpu.matmul %252, %170, %cst_45 {dimension_numbers = #tpu.dot_dimension_numbers<[1], [0], [0], [1], [0, 0, 1, 1], [], []>} : vector<8x32xf32>, vector<32x128xf32>, vector<8x128xf32> -> vector<8x128xf32>
    %255 = arith.addf %253, %254 : vector<8x128xf32>
    %256 = vector.extract_strided_slice %255 {offsets = [0, 0], sizes = [8, 96], strides = [1, 1]} : vector<8x128xf32> to vector<8x96xf32>
    %257 = arith.negf %256 : vector<8x96xf32>
    %258 = math.exp %257 : vector<8x96xf32>
    %cst_46 = arith.constant 1.000000e+00 : f32
    %259 = vector.broadcast %cst_46 : f32 to vector<8x96xf32>
    %260 = arith.addf %259, %258 : vector<8x96xf32>
    %261 = arith.divf %259, %260 : vector<8x96xf32>
    %262 = vector.extract_strided_slice %255 {offsets = [0, 96], sizes = [8, 32], strides = [1, 1]} : vector<8x128xf32> to vector<8x32xf32>
    %263 = math.tanh %262 : vector<8x32xf32>
    %264 = vector.extract_strided_slice %261 {offsets = [0, 32], sizes = [8, 32], strides = [1, 1]} : vector<8x96xf32> to vector<8x32xf32>
    %265 = arith.mulf %264, %249 : vector<8x32xf32>
    %266 = vector.extract_strided_slice %261 {offsets = [0, 0], sizes = [8, 32], strides = [1, 1]} : vector<8x96xf32> to vector<8x32xf32>
    %267 = arith.mulf %266, %263 : vector<8x32xf32>
    %268 = arith.addf %265, %267 : vector<8x32xf32>
    %269 = vector.extract_strided_slice %261 {offsets = [0, 64], sizes = [8, 32], strides = [1, 1]} : vector<8x96xf32> to vector<8x32xf32>
    %270 = math.tanh %268 : vector<8x32xf32>
    %271 = arith.mulf %269, %270 : vector<8x32xf32>
    %272 = vector.extract_strided_slice %174 {offsets = [40, 0], sizes = [8, 128], strides = [1, 1]} : vector<64x128xf32> to vector<8x128xf32>
    %cst_47 = arith.constant dense<0.000000e+00> : vector<8x128xf32>
    %273 = tpu.matmul %271, %170, %cst_47 {dimension_numbers = #tpu.dot_dimension_numbers<[1], [0], [0], [1], [0, 0, 1, 1], [], []>} : vector<8x32xf32>, vector<32x128xf32>, vector<8x128xf32> -> vector<8x128xf32>
    %274 = arith.addf %272, %273 : vector<8x128xf32>
    %275 = vector.extract_strided_slice %274 {offsets = [0, 0], sizes = [8, 96], strides = [1, 1]} : vector<8x128xf32> to vector<8x96xf32>
    %276 = arith.negf %275 : vector<8x96xf32>
    %277 = math.exp %276 : vector<8x96xf32>
    %cst_48 = arith.constant 1.000000e+00 : f32
    %278 = vector.broadcast %cst_48 : f32 to vector<8x96xf32>
    %279 = arith.addf %278, %277 : vector<8x96xf32>
    %280 = arith.divf %278, %279 : vector<8x96xf32>
    %281 = vector.extract_strided_slice %274 {offsets = [0, 96], sizes = [8, 32], strides = [1, 1]} : vector<8x128xf32> to vector<8x32xf32>
    %282 = math.tanh %281 : vector<8x32xf32>
    %283 = vector.extract_strided_slice %280 {offsets = [0, 32], sizes = [8, 32], strides = [1, 1]} : vector<8x96xf32> to vector<8x32xf32>
    %284 = arith.mulf %283, %268 : vector<8x32xf32>
    %285 = vector.extract_strided_slice %280 {offsets = [0, 0], sizes = [8, 32], strides = [1, 1]} : vector<8x96xf32> to vector<8x32xf32>
    %286 = arith.mulf %285, %282 : vector<8x32xf32>
    %287 = arith.addf %284, %286 : vector<8x32xf32>
    %288 = vector.extract_strided_slice %280 {offsets = [0, 64], sizes = [8, 32], strides = [1, 1]} : vector<8x96xf32> to vector<8x32xf32>
    %289 = math.tanh %287 : vector<8x32xf32>
    %290 = arith.mulf %288, %289 : vector<8x32xf32>
    %291 = vector.extract_strided_slice %174 {offsets = [48, 0], sizes = [8, 128], strides = [1, 1]} : vector<64x128xf32> to vector<8x128xf32>
    %cst_49 = arith.constant dense<0.000000e+00> : vector<8x128xf32>
    %292 = tpu.matmul %290, %170, %cst_49 {dimension_numbers = #tpu.dot_dimension_numbers<[1], [0], [0], [1], [0, 0, 1, 1], [], []>} : vector<8x32xf32>, vector<32x128xf32>, vector<8x128xf32> -> vector<8x128xf32>
    %293 = arith.addf %291, %292 : vector<8x128xf32>
    %294 = vector.extract_strided_slice %293 {offsets = [0, 0], sizes = [8, 96], strides = [1, 1]} : vector<8x128xf32> to vector<8x96xf32>
    %295 = arith.negf %294 : vector<8x96xf32>
    %296 = math.exp %295 : vector<8x96xf32>
    %cst_50 = arith.constant 1.000000e+00 : f32
    %297 = vector.broadcast %cst_50 : f32 to vector<8x96xf32>
    %298 = arith.addf %297, %296 : vector<8x96xf32>
    %299 = arith.divf %297, %298 : vector<8x96xf32>
    %300 = vector.extract_strided_slice %293 {offsets = [0, 96], sizes = [8, 32], strides = [1, 1]} : vector<8x128xf32> to vector<8x32xf32>
    %301 = math.tanh %300 : vector<8x32xf32>
    %302 = vector.extract_strided_slice %299 {offsets = [0, 32], sizes = [8, 32], strides = [1, 1]} : vector<8x96xf32> to vector<8x32xf32>
    %303 = arith.mulf %302, %287 : vector<8x32xf32>
    %304 = vector.extract_strided_slice %299 {offsets = [0, 0], sizes = [8, 32], strides = [1, 1]} : vector<8x96xf32> to vector<8x32xf32>
    %305 = arith.mulf %304, %301 : vector<8x32xf32>
    %306 = arith.addf %303, %305 : vector<8x32xf32>
    %307 = vector.extract_strided_slice %299 {offsets = [0, 64], sizes = [8, 32], strides = [1, 1]} : vector<8x96xf32> to vector<8x32xf32>
    %308 = math.tanh %306 : vector<8x32xf32>
    %309 = arith.mulf %307, %308 : vector<8x32xf32>
    %310 = vector.extract_strided_slice %174 {offsets = [56, 0], sizes = [8, 128], strides = [1, 1]} : vector<64x128xf32> to vector<8x128xf32>
    %cst_51 = arith.constant dense<0.000000e+00> : vector<8x128xf32>
    %311 = tpu.matmul %309, %170, %cst_51 {dimension_numbers = #tpu.dot_dimension_numbers<[1], [0], [0], [1], [0, 0, 1, 1], [], []>} : vector<8x32xf32>, vector<32x128xf32>, vector<8x128xf32> -> vector<8x128xf32>
    %312 = arith.addf %310, %311 : vector<8x128xf32>
    %313 = vector.extract_strided_slice %312 {offsets = [0, 0], sizes = [8, 96], strides = [1, 1]} : vector<8x128xf32> to vector<8x96xf32>
    %314 = arith.negf %313 : vector<8x96xf32>
    %315 = math.exp %314 : vector<8x96xf32>
    %cst_52 = arith.constant 1.000000e+00 : f32
    %316 = vector.broadcast %cst_52 : f32 to vector<8x96xf32>
    %317 = arith.addf %316, %315 : vector<8x96xf32>
    %318 = arith.divf %316, %317 : vector<8x96xf32>
    %319 = vector.extract_strided_slice %312 {offsets = [0, 96], sizes = [8, 32], strides = [1, 1]} : vector<8x128xf32> to vector<8x32xf32>
    %320 = math.tanh %319 : vector<8x32xf32>
    %321 = vector.extract_strided_slice %318 {offsets = [0, 32], sizes = [8, 32], strides = [1, 1]} : vector<8x96xf32> to vector<8x32xf32>
    %322 = arith.mulf %321, %306 : vector<8x32xf32>
    %323 = vector.extract_strided_slice %318 {offsets = [0, 0], sizes = [8, 32], strides = [1, 1]} : vector<8x96xf32> to vector<8x32xf32>
    %324 = arith.mulf %323, %320 : vector<8x32xf32>
    %325 = arith.addf %322, %324 : vector<8x32xf32>
    %326 = vector.extract_strided_slice %318 {offsets = [0, 64], sizes = [8, 32], strides = [1, 1]} : vector<8x96xf32> to vector<8x32xf32>
    %327 = math.tanh %325 : vector<8x32xf32>
    %328 = arith.mulf %326, %327 : vector<8x32xf32>
    %329 = tpu.concatenate %195, %214, %233, %252, %271, %290, %309, %328, %167, %164, %328, %325 in 1 : vector<8x32xf32>, vector<8x32xf32>, vector<8x32xf32>, vector<8x32xf32>, vector<8x32xf32>, vector<8x32xf32>, vector<8x32xf32>, vector<8x32xf32>, vector<8x32xf32>, vector<8x32xf32>, vector<8x32xf32>, vector<8x32xf32> -> vector<8x384xf32>
    %c0_53 = arith.constant 0 : index
    %c0_54 = arith.constant 0 : index
    %330 = vector.load %arg9[%c0_53, %c0_54] : memref<8x384xf32, #tpu.memory_space<vmem>>, vector<8x384xf32>
    tpu.vector_store %arg9[%c0_53, %c0_54], %329 {strides = array<i32>} : memref<8x384xf32, #tpu.memory_space<vmem>>, vector<8x384xf32>,
    return
  }
  func.func @transform_0(%arg0: i32) -> (i32, i32) {
    %c0_i32 = arith.constant 0 : i32
    %c0_i32_0 = arith.constant 0 : i32
    %c0_i32_1 = arith.constant 0 : i32
    return %c0_i32, %c0_i32_0 : i32, i32
  }
  func.func @transform_1(%arg0: i32) -> (i32, i32) {
    %c0_i32 = arith.constant 0 : i32
    %c0_i32_0 = arith.constant 0 : i32
    %c0_i32_1 = arith.constant 0 : i32
    return %c0_i32, %c0_i32_0 : i32, i32
  }
  func.func @transform_2(%arg0: i32) -> (i32, i32) {
    %c0_i32 = arith.constant 0 : i32
    %c0_i32_0 = arith.constant 0 : i32
    %c0_i32_1 = arith.constant 0 : i32
    return %c0_i32, %c0_i32_0 : i32, i32
  }
  func.func @transform_3(%arg0: i32) -> (i32, i32) {
    %c0_i32 = arith.constant 0 : i32
    %c0_i32_0 = arith.constant 0 : i32
    %c0_i32_1 = arith.constant 0 : i32
    return %c0_i32, %c0_i32_0 : i32, i32
  }
  func.func @transform_4(%arg0: i32) -> (i32, i32) {
    %c0_i32 = arith.constant 0 : i32
    %c0_i32_0 = arith.constant 0 : i32
    %c0_i32_1 = arith.constant 0 : i32
    return %c0_i32, %c0_i32_0 : i32, i32
  }
  func.func @transform_5(%arg0: i32) -> (i32, i32) {
    %c0_i32 = arith.constant 0 : i32
    %c0_i32_0 = arith.constant 0 : i32
    %c0_i32_1 = arith.constant 0 : i32
    return %c0_i32, %c0_i32_0 : i32, i32
  }
  func.func @transform_6(%arg0: i32) -> (i32, i32) {
    %c0_i32 = arith.constant 0 : i32
    %c0_i32_0 = arith.constant 0 : i32
    %c0_i32_1 = arith.constant 0 : i32
    return %c0_i32, %c0_i32_0 : i32, i32
  }
  func.func @transform_7(%arg0: i32) -> (i32, i32) {
    %c0_i32 = arith.constant 0 : i32
    %c0_i32_0 = arith.constant 0 : i32
    %c0_i32_1 = arith.constant 0 : i32
    return %c0_i32, %c0_i32_0 : i32, i32
  }
  func.func @transform_8(%arg0: i32) -> (i32, i32) {
    %c0_i32 = arith.constant 0 : i32
    %c0_i32_0 = arith.constant 0 : i32
    %c0_i32_1 = arith.constant 0 : i32
    return %c0_i32, %c0_i32_0 : i32, i32
  }
}

</mosaic_0001>

<llo_original>
// kernel: tpu_custom_call.1
$region0: #{tpu_custom_call.1}
  #allocation0 [shape = 'u32[]', space=smem, size = 0x4, offset = 0x4, fixed_abs, tag = 'smem constant byte address 0x4 - core index']
  #allocation1 [shape = 'u32[144,128]{1,0:T(1,128)}', space=vmem, size = 0x12000, scoped, tag = 'internal scratch']
  %s0 = inlined_call_operand.vmem [shape: s32[64,1], index: 0, kind: input, shape index: {}]
  %s1 = inlined_call_operand.hbm [shape: f32[16,32], index: 1, kind: input, shape index: {}]
  %s2 = inlined_call_operand.vmem [shape: f32[32,128], index: 2, kind: input, shape index: {}]
  %s3 = inlined_call_operand.vmem [shape: f32[32,128], index: 3, kind: input, shape index: {}]
  %s4 = inlined_call_operand.vmem [shape: f32[1,128], index: 4, kind: input, shape index: {}]
  %s5 = inlined_call_operand.hbm [shape: f32[32,128], index: 5, kind: input, shape index: {}]
  %s6 = inlined_call_operand.hbm [shape: f32[32,128], index: 6, kind: input, shape index: {}]
  %s7 = inlined_call_operand.vmem [shape: f32[1,128], index: 7, kind: input, shape index: {}]
  %s8 = inlined_call_operand.hbm [shape: f32[8,384], index: 8, kind: output, shape index: {}]
  %s9 = sld [smem:[#allocation0]]
  $region54: #{tpu_custom_call.1} parent=0
    _
  %s11 = ssub.s32 1, %s9
  %s12 = scalar_select 0, %s11, %s9
  $region1: #{tpu_custom_call.1} parent=0
    #allocation2 [shape = 'u8[8192]{0}', space=vmem, size = 0x2000, scoped, tag = 'input window, operand 1, single buffered']
    #allocation3 [shape = 's32[1]{0}', space=sflag, size = 0x4, scoped, tag = 'scoped memory for tpu_custom_call.1']
    #allocation4 [shape = 's32[1]{0}', space=sflag, size = 0x4, scoped, tag = 'scoped memory for tpu_custom_call.1']
    #allocation5 [shape = 'u8[16384]{0}', space=vmem, size = 0x4000, scoped, tag = 'input window, operand 5, single buffered']
    #allocation6 [shape = 's32[1]{0}', space=sflag, size = 0x4, scoped, tag = 'scoped memory for tpu_custom_call.1']
    #allocation7 [shape = 'u8[16384]{0}', space=vmem, size = 0x4000, scoped, tag = 'input window, operand 6, single buffered']
    #allocation8 [shape = 'u8[12288]{0}', space=vmem, size = 0x3000, scoped, tag = 'output window, operand 0, single buffered']
    %13 = vsyncpa [#allocation3], 0
    %14 = vsyncpa [#allocation6], 0
    %15 = vsyncpa [#allocation4], 0
    // Predicated region
    $region2: #{tpu_custom_call.1} parent=1 // pred_check
      _
    $region3: #{tpu_custom_call.1} parent=1 // pred_check_branch
      %17 = sbr.rel (0) target = $region5
    $region4: #{tpu_custom_call.1} parent=1 // pred_region
      _
    $region5: #{tpu_custom_call.1} parent=1 // pred_fallthru
      _
    // Predicated region
    $region6: #{tpu_custom_call.1} parent=1 // pred_check
      _
    $region7: #{tpu_custom_call.1} parent=1 // pred_check_branch
      %19 = sbr.rel (0) target = $region9
    $region8: #{tpu_custom_call.1} parent=1 // pred_region
      %s21 = ssub.s32 256, 256
      %22 = vsyncadd [#allocation3], %s21
      %s23 = sshll.u32 [#allocation2], 4
      %s24 = int_to_ptr.vmem [resolvable:$true] %s23
      %29 = dma.hbm_to_vmem [thread:$0]  %s1, 256, %s24, [#allocation3], 128, 128, 8
    $region9: #{tpu_custom_call.1} parent=1 // pred_fallthru
      _
    // Predicated region
    $region10: #{tpu_custom_call.1} parent=1 // pred_check
      _
    $region11: #{tpu_custom_call.1} parent=1 // pred_check_branch
      %31 = sbr.rel (0) target = $region13
    $region12: #{tpu_custom_call.1} parent=1 // pred_region
      _
    $region13: #{tpu_custom_call.1} parent=1 // pred_fallthru
      _
    // Predicated region
    $region14: #{tpu_custom_call.1} parent=1 // pred_check
      _
    $region15: #{tpu_custom_call.1} parent=1 // pred_check_branch
      %33 = sbr.rel (0) target = $region17
    $region16: #{tpu_custom_call.1} parent=1 // pred_region
      _
    $region17: #{tpu_custom_call.1} parent=1 // pred_fallthru
      _
    // Predicated region
    $region18: #{tpu_custom_call.1} parent=1 // pred_check
      _
    $region19: #{tpu_custom_call.1} parent=1 // pred_check_branch
      %35 = sbr.rel (0) target = $region21
    $region20: #{tpu_custom_call.1} parent=1 // pred_region
      _
    $region21: #{tpu_custom_call.1} parent=1 // pred_fallthru
      _
    // Predicated region
    $region22: #{tpu_custom_call.1} parent=1 // pred_check
      _
    $region23: #{tpu_custom_call.1} parent=1 // pred_check_branch
      %37 = sbr.rel (0) target = $region25
    $region24: #{tpu_custom_call.1} parent=1 // pred_region
      %s39 = ssub.s32 512, 512
      %40 = vsyncadd [#allocation6], %s39
      %s41 = sshll.u32 [#allocation5], 4
      %s42 = int_to_ptr.vmem [resolvable:$true] %s41
      %47 = dma.hbm_to_vmem [thread:$0]  %s5, 512, %s42, [#allocation6], 128, 128, 8
    $region25: #{tpu_custom_call.1} parent=1 // pred_fallthru
      _
    // Predicated region
    $region26: #{tpu_custom_call.1} parent=1 // pred_check
      _
    $region27: #{tpu_custom_call.1} parent=1 // pred_check_branch
      %49 = sbr.rel (0) target = $region29
    $region28: #{tpu_custom_call.1} parent=1 // pred_region
      %s51 = ssub.s32 512, 512
      %52 = vsyncadd [#allocation6], %s51
      %s53 = sshll.u32 [#allocation7], 4
      %s54 = int_to_ptr.vmem [resolvable:$true] %s53
      %59 = dma.hbm_to_vmem [thread:$0]  %s6, 512, %s54, [#allocation6], 128, 128, 8
    $region29: #{tpu_custom_call.1} parent=1 // pred_fallthru
      _
    // Predicated region
    $region30: #{tpu_custom_call.1} parent=1 // pred_check
      _
    $region31: #{tpu_custom_call.1} parent=1 // pred_check_branch
      %61 = sbr.rel (0) target = $region33
    $region32: #{tpu_custom_call.1} parent=1 // pred_region
      _
    $region33: #{tpu_custom_call.1} parent=1 // pred_fallthru
      _
    // Predicated region
    $region34: #{tpu_custom_call.1} parent=1 // pred_check
      _
    $region35: #{tpu_custom_call.1} parent=1 // pred_check_branch
      %63 = sbr.rel (0) target = $region37
    $region36: #{tpu_custom_call.1} parent=1 // pred_region
      %64 = dma.done [#allocation3], 256
    $region37: #{tpu_custom_call.1} parent=1 // pred_fallthru
      _
    // Predicated region
    $region38: #{tpu_custom_call.1} parent=1 // pred_check
      _
    $region39: #{tpu_custom_call.1} parent=1 // pred_check_branch
      %66 = sbr.rel (0) target = $region41
    $region40: #{tpu_custom_call.1} parent=1 // pred_region
      %67 = dma.done [#allocation6], 512
    $region41: #{tpu_custom_call.1} parent=1 // pred_fallthru
      _
    // Predicated region
    $region42: #{tpu_custom_call.1} parent=1 // pred_check
      _
    $region43: #{tpu_custom_call.1} parent=1 // pred_check_branch
      %69 = sbr.rel (0) target = $region45
    $region44: #{tpu_custom_call.1} parent=1 // pred_region
      %70 = dma.done [#allocation6], 512
    $region45: #{tpu_custom_call.1} parent=1 // pred_fallthru
      _
    %v71 = vld [vmem:[%s0] sm:$0xff]
    %v72 = vld [vmem:[%s0 + $0x8] sm:$0xff]
    %v73 = vld [vmem:[%s0 + $0x10] sm:$0xff]
    %v74 = vld [vmem:[%s0 + $0x18] sm:$0xff]
    %v75 = vld [vmem:[%s0 + $0x20] sm:$0xff]
    %v76 = vld [vmem:[%s0 + $0x28] sm:$0xff]
    %v77 = vld [vmem:[%s0 + $0x30] sm:$0xff]
    %v78 = vld [vmem:[%s0 + $0x38] sm:$0xff]
    %v79 = vlaneseq
    %v80 = vand.u32 %v79, 127
    %81 = vset.pattern.permute.xlu0 0
    %82 = vperm.xlu0 %81, %v71
    %v83 = vpop.permute.xlu0 %82
    %84 = vset.pattern.permute.xlu0 0
    %85 = vperm.xlu0 %84, %v72
    %v86 = vpop.permute.xlu0 %85
    %87 = vset.pattern.permute.xlu0 0
    %88 = vperm.xlu0 %87, %v73
    %v89 = vpop.permute.xlu0 %88
    %90 = vset.pattern.permute.xlu0 0
    %91 = vperm.xlu0 %90, %v74
    %v92 = vpop.permute.xlu0 %91
    %93 = vset.pattern.permute.xlu0 0
    %94 = vperm.xlu0 %93, %v75
    %v95 = vpop.permute.xlu0 %94
    %96 = vset.pattern.permute.xlu0 0
    %97 = vperm.xlu0 %96, %v76
    %v98 = vpop.permute.xlu0 %97
    %99 = vset.pattern.permute.xlu0 0
    %100 = vperm.xlu0 %99, %v77
    %v101 = vpop.permute.xlu0 %100
    %102 = vset.pattern.permute.xlu0 0
    %103 = vperm.xlu0 %102, %v78
    %v104 = vpop.permute.xlu0 %103
    %vm105 = vcmp.eq.s32.totalorder %v80, %v83
    %vm106 = vcmp.eq.s32.totalorder %v80, %v86
    %vm107 = vcmp.eq.s32.totalorder %v80, %v89
    %vm108 = vcmp.eq.s32.totalorder %v80, %v92
    %vm109 = vcmp.eq.s32.totalorder %v80, %v95
    %vm110 = vcmp.eq.s32.totalorder %v80, %v98
    %vm111 = vcmp.eq.s32.totalorder %v80, %v101
    %vm112 = vcmp.eq.s32.totalorder %v80, %v104
    %v113 = vsel %vm105, 1, 0
    %v114 = vsel %vm106, 1, 0
    %v115 = vsel %vm107, 1, 0
    %v116 = vsel %vm108, 1, 0
    %v117 = vsel %vm109, 1, 0
    %v118 = vsel %vm110, 1, 0
    %v119 = vsel %vm111, 1, 0
    %v120 = vsel %vm112, 1, 0
    %v121 = vcvt.s32.f32 %v113
    %v122 = vcvt.s32.f32 %v114
    %v123 = vcvt.s32.f32 %v115
    %v124 = vcvt.s32.f32 %v116
    %v125 = vcvt.s32.f32 %v117
    %v126 = vcvt.s32.f32 %v118
    %v127 = vcvt.s32.f32 %v119
    %v128 = vcvt.s32.f32 %v120
    %v129 = vld [vmem:[#allocation2] sm:$0xff]
    %v130 = vld [vmem:[#allocation2 + $0x8] sm:$0xff]
    %vm131 = vcmask 130048
    %v133 = vsel %vm131, %v121, 0
    %v136 = vsel %vm131, %v122, 0
    %v139 = vsel %vm131, %v123, 0
    %v142 = vsel %vm131, %v124, 0
    %v145 = vsel %vm131, %v125, 0
    %v148 = vsel %vm131, %v126, 0
    %v151 = vsel %vm131, %v127, 0
    %v154 = vsel %vm131, %v128, 0
    %156 = vmatprep.subr.mxu0 0.0
    %157 = vmatpush1.msra.mxu0 %v129
    %158 = vmatprep.subr.mxu0 0.0
    %159 = vmatpush1.msra.mxu0 %v130
    %160 = vmatprep.subr.mxu0 0.0
    %161 = vmatpush1.msra.mxu0 0.0
    %162 = vmatprep.subr.mxu0 0.0
    %163 = vmatpush1.msra.mxu0 0.0
    %164 = vmatprep.subr.mxu0 0.0
    %165 = vmatpush1.msra.mxu0 0.0
    %166 = vmatprep.subr.mxu0 0.0
    %167 = vmatpush1.msra.mxu0 0.0
    %168 = vmatprep.subr.mxu0 0.0
    %169 = vmatpush1.msra.mxu0 0.0
    %170 = vmatprep.subr.mxu0 0.0
    %171 = vmatpush1.msra.mxu0 0.0
    %172 = vmatprep.subr.mxu0 0.0
    %173 = vmatpush1.msra.mxu0 0.0
    %174 = vmatprep.subr.mxu0 0.0
    %175 = vmatpush1.msra.mxu0 0.0
    %176 = vmatprep.subr.mxu0 0.0
    %177 = vmatpush1.msra.mxu0 0.0
    %178 = vmatprep.subr.mxu0 0.0
    %179 = vmatpush1.msra.mxu0 0.0
    %180 = vmatprep.subr.mxu0 0.0
    %181 = vmatpush1.msra.mxu0 0.0
    %182 = vmatprep.subr.mxu0 0.0
    %183 = vmatpush1.msra.mxu0 0.0
    %184 = vmatprep.subr.mxu0 0.0
    %185 = vmatpush1.msra.mxu0 0.0
    %186 = vmatprep.subr.mxu0 0.0
    %187 = vmatpush1.msra.mxu0 0.0
    %188 = vmatprep.subr.mxu0 0.0
    %189 = vmatpush1.msra.mxu0 0.0
    %190 = vmatprep.subr.mxu0 0.0
    %191 = vmatpush1.msra.mxu0 0.0
    %192 = vmatprep.subr.mxu0 0.0
    %193 = vmatpush1.msra.mxu0 0.0
    %194 = vmatprep.subr.mxu0 0.0
    %195 = vmatpush1.msra.mxu0 0.0
    %196 = vmatprep.subr.mxu0 0.0
    %197 = vmatpush1.msra.mxu0 0.0
    %198 = vmatprep.subr.mxu0 0.0
    %199 = vmatpush1.msra.mxu0 0.0
    %200 = vmatprep.subr.mxu0 0.0
    %201 = vmatpush1.msra.mxu0 0.0
    %202 = vmatprep.subr.mxu0 0.0
    %203 = vmatpush1.msra.mxu0 0.0
    %204 = vmatprep.subr.mxu0 0.0
    %205 = vmatpush1.msra.mxu0 0.0
    %206 = vmatprep.subr.mxu0 0.0
    %207 = vmatpush1.msra.mxu0 0.0
    %208 = vmatprep.subr.mxu0 0.0
    %209 = vmatpush1.msra.mxu0 0.0
    %210 = vmatprep.subr.mxu0 0.0
    %211 = vmatpush1.msra.mxu0 0.0
    %212 = vmatprep.subr.mxu0 0.0
    %213 = vmatpush1.msra.mxu0 0.0
    %214 = vmatprep.subr.mxu0 0.0
    %215 = vmatpush1.msra.mxu0 0.0
    %216 = vmatprep.subr.mxu0 0.0
    %217 = vmatpush1.msra.mxu0 0.0
    %218 = vmatprep.subr.mxu0 0.0
    %219 = vmatpush1.msra.mxu0 0.0
    %220 = vmatprep.mubr.f32.mxu0 0.0
    %221 = vmatmul.mubr.f32.gmra.mrb[0].mxu0 %v133
    %v222 = vpop.f32.mrb[0].mxu0
    %v223 = vadd.f32 0.0, %v222
    %v224 = vpop.f32.mrb[0].mxu0
    %225 = vmatprep.mubr.f32.mxu0 0.0
    %226 = vmatmul.mubr.f32.gmra.mrb[0].mxu0 %v136
    %v227 = vpop.f32.mrb[0].mxu0
    %v228 = vadd.f32 0.0, %v227
    %v229 = vpop.f32.mrb[0].mxu0
    %230 = vmatprep.mubr.f32.mxu0 0.0
    %231 = vmatmul.mubr.f32.gmra.mrb[0].mxu0 %v139
    %v232 = vpop.f32.mrb[0].mxu0
    %v233 = vadd.f32 0.0, %v232
    %v234 = vpop.f32.mrb[0].mxu0
    %235 = vmatprep.mubr.f32.mxu0 0.0
    %236 = vmatmul.mubr.f32.gmra.mrb[0].mxu0 %v142
    %v237 = vpop.f32.mrb[0].mxu0
    %v238 = vadd.f32 0.0, %v237
    %v239 = vpop.f32.mrb[0].mxu0
    %240 = vmatprep.mubr.f32.mxu0 0.0
    %241 = vmatmul.mubr.f32.gmra.mrb[0].mxu0 %v145
    %v242 = vpop.f32.mrb[0].mxu0
    %v243 = vadd.f32 0.0, %v242
    %v244 = vpop.f32.mrb[0].mxu0
    %245 = vmatprep.mubr.f32.mxu0 0.0
    %246 = vmatmul.mubr.f32.gmra.mrb[0].mxu0 %v148
    %v247 = vpop.f32.mrb[0].mxu0
    %v248 = vadd.f32 0.0, %v247
    %v249 = vpop.f32.mrb[0].mxu0
    %250 = vmatprep.mubr.f32.mxu0 0.0
    %251 = vmatmul.mubr.f32.gmra.mrb[0].mxu0 %v151
    %v252 = vpop.f32.mrb[0].mxu0
    %v253 = vadd.f32 0.0, %v252
    %v254 = vpop.f32.mrb[0].mxu0
    %255 = vmatprep.mubr.f32.mxu0 0.0
    %256 = vmatmul.mubr.f32.gmra.mrb[0].mxu0 %v154
    %v257 = vpop.f32.mrb[0].mxu0
    %v258 = vadd.f32 0.0, %v257
    %v259 = vpop.f32.mrb[0].mxu0
    %260 = vdwg.mxu0
    %v261 = vld [vmem:[%s2] sm:$0xff]
    %v262 = vld [vmem:[%s2 + $0x8] sm:$0xff]
    %v263 = vld [vmem:[%s2 + $0x10] sm:$0xff]
    %v264 = vld [vmem:[%s2 + $0x18] sm:$0xff]
    %v265 = vld [vmem:[%s3] sm:$0xff]
    %v266 = vld [vmem:[%s3 + $0x8] sm:$0xff]
    %v267 = vld [vmem:[%s3 + $0x10] sm:$0xff]
    %v268 = vld [vmem:[%s3 + $0x18] sm:$0xff]
    %v269 = vld [vmem:[%s4] sm:$0x1]
    %v271 = vlaneseq
    %v272 = vshrl.u32 %v271, 7
    %v273 = vsub.s32 0, %v272
    %v274 = vrot.slane %v269, %v273
    %vm276 = vcmask 261120
    %v278 = vsel %vm276, %v223, 0
    %v281 = vsel %vm276, %v228, 0
    %v284 = vsel %vm276, %v233, 0
    %v287 = vsel %vm276, %v238, 0
    %v290 = vsel %vm276, %v243, 0
    %v293 = vsel %vm276, %v248, 0
    %v296 = vsel %vm276, %v253, 0
    %v299 = vsel %vm276, %v258, 0
    %301 = vmatprep.subr.mxu0 0.0
    %302 = vmatpush1.msra.mxu0 %v261
    %303 = vmatprep.subr.mxu0 0.0
    %304 = vmatpush1.msra.mxu0 %v262
    %305 = vmatprep.subr.mxu0 0.0
    %306 = vmatpush1.msra.mxu0 %v263
    %307 = vmatprep.subr.mxu0 0.0
    %308 = vmatpush1.msra.mxu0 %v264
    %309 = vmatprep.subr.mxu0 0.0
    %310 = vmatpush1.msra.mxu0 0.0
    %311 = vmatprep.subr.mxu0 0.0
    %312 = vmatpush1.msra.mxu0 0.0
    %313 = vmatprep.subr.mxu0 0.0
    %314 = vmatpush1.msra.mxu0 0.0
    %315 = vmatprep.subr.mxu0 0.0
    %316 = vmatpush1.msra.mxu0 0.0
    %317 = vmatprep.subr.mxu0 0.0
    %318 = vmatpush1.msra.mxu0 0.0
    %319 = vmatprep.subr.mxu0 0.0
    %320 = vmatpush1.msra.mxu0 0.0
    %321 = vmatprep.subr.mxu0 0.0
    %322 = vmatpush1.msra.mxu0 0.0
    %323 = vmatprep.subr.mxu0 0.0
    %324 = vmatpush1.msra.mxu0 0.0
    %325 = vmatprep.subr.mxu0 0.0
    %326 = vmatpush1.msra.mxu0 0.0
    %327 = vmatprep.subr.mxu0 0.0
    %328 = vmatpush1.msra.mxu0 0.0
    %329 = vmatprep.subr.mxu0 0.0
    %330 = vmatpush1.msra.mxu0 0.0
    %331 = vmatprep.subr.mxu0 0.0
    %332 = vmatpush1.msra.mxu0 0.0
    %333 = vmatprep.subr.mxu0 0.0
    %334 = vmatpush1.msra.mxu0 0.0
    %335 = vmatprep.subr.mxu0 0.0
    %336 = vmatpush1.msra.mxu0 0.0
    %337 = vmatprep.subr.mxu0 0.0
    %338 = vmatpush1.msra.mxu0 0.0
    %339 = vmatprep.subr.mxu0 0.0
    %340 = vmatpush1.msra.mxu0 0.0
    %341 = vmatprep.subr.mxu0 0.0
    %342 = vmatpush1.msra.mxu0 0.0
    %343 = vmatprep.subr.mxu0 0.0
    %344 = vmatpush1.msra.mxu0 0.0
    %345 = vmatprep.subr.mxu0 0.0
    %346 = vmatpush1.msra.mxu0 0.0
    %347 = vmatprep.subr.mxu0 0.0
    %348 = vmatpush1.msra.mxu0 0.0
    %349 = vmatprep.subr.mxu0 0.0
    %350 = vmatpush1.msra.mxu0 0.0
    %351 = vmatprep.subr.mxu0 0.0
    %352 = vmatpush1.msra.mxu0 0.0
    %353 = vmatprep.subr.mxu0 0.0
    %354 = vmatpush1.msra.mxu0 0.0
    %355 = vmatprep.subr.mxu0 0.0
    %356 = vmatpush1.msra.mxu0 0.0
    %357 = vmatprep.subr.mxu0 0.0
    %358 = vmatpush1.msra.mxu0 0.0
    %359 = vmatprep.subr.mxu0 0.0
    %360 = vmatpush1.msra.mxu0 0.0
    %361 = vmatprep.subr.mxu0 0.0
    %362 = vmatpush1.msra.mxu0 0.0
    %363 = vmatprep.subr.mxu0 0.0
    %364 = vmatpush1.msra.mxu0 0.0
    %365 = vmatprep.mubr.f32.mxu0 0.0
    %366 = vmatmul.mubr.f32.gmra.mrb[0].mxu0 %v278
    %v367 = vpop.f32.mrb[0].mxu0
    %v368 = vadd.f32 %v274, %v367
    %v369 = vpop.f32.mrb[0].mxu0
    %370 = vmatprep.mubr.f32.mxu0 0.0
    %371 = vmatmul.mubr.f32.gmra.mrb[0].mxu0 %v281
    %v372 = vpop.f32.mrb[0].mxu0
    %v373 = vadd.f32 %v274, %v372
    %v374 = vpop.f32.mrb[0].mxu0
    %375 = vmatprep.mubr.f32.mxu0 0.0
    %376 = vmatmul.mubr.f32.gmra.mrb[0].mxu0 %v284
    %v377 = vpop.f32.mrb[0].mxu0
    %v378 = vadd.f32 %v274, %v377
    %v379 = vpop.f32.mrb[0].mxu0
    %380 = vmatprep.mubr.f32.mxu0 0.0
    %381 = vmatmul.mubr.f32.gmra.mrb[0].mxu0 %v287
    %v382 = vpop.f32.mrb[0].mxu0
    %v383 = vadd.f32 %v274, %v382
    %v384 = vpop.f32.mrb[0].mxu0
    %385 = vmatprep.mubr.f32.mxu0 0.0
    %386 = vmatmul.mubr.f32.gmra.mrb[0].mxu0 %v290
    %v387 = vpop.f32.mrb[0].mxu0
    %v388 = vadd.f32 %v274, %v387
    %v389 = vpop.f32.mrb[0].mxu0
    %390 = vmatprep.mubr.f32.mxu0 0.0
    %391 = vmatmul.mubr.f32.gmra.mrb[0].mxu0 %v293
    %v392 = vpop.f32.mrb[0].mxu0
    %v393 = vadd.f32 %v274, %v392
    %v394 = vpop.f32.mrb[0].mxu0
    %395 = vmatprep.mubr.f32.mxu0 0.0
    %396 = vmatmul.mubr.f32.gmra.mrb[0].mxu0 %v296
    %v397 = vpop.f32.mrb[0].mxu0
    %v398 = vadd.f32 %v274, %v397
    %v399 = vpop.f32.mrb[0].mxu0
    %400 = vmatprep.mubr.f32.mxu0 0.0
    %401 = vmatmul.mubr.f32.gmra.mrb[0].mxu0 %v299
    %v402 = vpop.f32.mrb[0].mxu0
    %v403 = vadd.f32 %v274, %v402
    %v404 = vpop.f32.mrb[0].mxu0
    %405 = vdwg.mxu0
    %v407 = vsel %vm276, 0.0, 0
    %409 = vmatprep.subr.mxu0 0.0
    %410 = vmatpush1.msra.mxu0 %v265
    %411 = vmatprep.subr.mxu0 0.0
    %412 = vmatpush1.msra.mxu0 %v266
    %413 = vmatprep.subr.mxu0 0.0
    %414 = vmatpush1.msra.mxu0 %v267
    %415 = vmatprep.subr.mxu0 0.0
    %416 = vmatpush1.msra.mxu0 %v268
    %417 = vmatprep.subr.mxu0 0.0
    %418 = vmatpush1.msra.mxu0 0.0
    %419 = vmatprep.subr.mxu0 0.0
    %420 = vmatpush1.msra.mxu0 0.0
    %421 = vmatprep.subr.mxu0 0.0
    %422 = vmatpush1.msra.mxu0 0.0
    %423 = vmatprep.subr.mxu0 0.0
    %424 = vmatpush1.msra.mxu0 0.0
    %425 = vmatprep.subr.mxu0 0.0
    %426 = vmatpush1.msra.mxu0 0.0
    %427 = vmatprep.subr.mxu0 0.0
    %428 = vmatpush1.msra.mxu0 0.0
    %429 = vmatprep.subr.mxu0 0.0
    %430 = vmatpush1.msra.mxu0 0.0
    %431 = vmatprep.subr.mxu0 0.0
    %432 = vmatpush1.msra.mxu0 0.0
    %433 = vmatprep.subr.mxu0 0.0
    %434 = vmatpush1.msra.mxu0 0.0
    %435 = vmatprep.subr.mxu0 0.0
    %436 = vmatpush1.msra.mxu0 0.0
    %437 = vmatprep.subr.mxu0 0.0
    %438 = vmatpush1.msra.mxu0 0.0
    %439 = vmatprep.subr.mxu0 0.0
    %440 = vmatpush1.msra.mxu0 0.0
    %441 = vmatprep.subr.mxu0 0.0
    %442 = vmatpush1.msra.mxu0 0.0
    %443 = vmatprep.subr.mxu0 0.0
    %444 = vmatpush1.msra.mxu0 0.0
    %445 = vmatprep.subr.mxu0 0.0
    %446 = vmatpush1.msra.mxu0 0.0
    %447 = vmatprep.subr.mxu0 0.0
    %448 = vmatpush1.msra.mxu0 0.0
    %449 = vmatprep.subr.mxu0 0.0
    %450 = vmatpush1.msra.mxu0 0.0
    %451 = vmatprep.subr.mxu0 0.0
    %452 = vmatpush1.msra.mxu0 0.0
    %453 = vmatprep.subr.mxu0 0.0
    %454 = vmatpush1.msra.mxu0 0.0
    %455 = vmatprep.subr.mxu0 0.0
    %456 = vmatpush1.msra.mxu0 0.0
    %457 = vmatprep.subr.mxu0 0.0
    %458 = vmatpush1.msra.mxu0 0.0
    %459 = vmatprep.subr.mxu0 0.0
    %460 = vmatpush1.msra.mxu0 0.0
    %461 = vmatprep.subr.mxu0 0.0
    %462 = vmatpush1.msra.mxu0 0.0
    %463 = vmatprep.subr.mxu0 0.0
    %464 = vmatpush1.msra.mxu0 0.0
    %465 = vmatprep.subr.mxu0 0.0
    %466 = vmatpush1.msra.mxu0 0.0
    %467 = vmatprep.subr.mxu0 0.0
    %468 = vmatpush1.msra.mxu0 0.0
    %469 = vmatprep.subr.mxu0 0.0
    %470 = vmatpush1.msra.mxu0 0.0
    %471 = vmatprep.subr.mxu0 0.0
    %472 = vmatpush1.msra.mxu0 0.0
    %473 = vmatprep.mubr.f32.mxu0 0.0
    %474 = vmatmul.mubr.f32.gmra.mrb[0].mxu0 %v407
    %v475 = vpop.f32.mrb[0].mxu0
    %v476 = vadd.f32 0.0, %v475
    %v477 = vpop.f32.mrb[0].mxu0
    %478 = vdwg.mxu0
    %v479 = vadd.f32 %v368, %v476
    %v480 = vxor.u32 %v479, 2147483648
    %v481 = vmul.f32 %v480, 1.442695
    %v482 = vpow.pop %v481
    %v483 = vadd.f32 %v482, 1.0
    %v484 = vrcp.pop %v483
    %v485 = vmul.f32 1.0, %v484
    %v486 = vtanh.pop %v479
    %v487 = vmul.f32 %v485, 0.0
    %489 = vrot.lane.b32.xlu0 %v486, 32
    %v490 = vpop.permute.xlu0 %489
    %v492 = vmul.f32 %v485, %v490
    %494 = vrot.lane.b32.xlu0 %v492, 32
    %v495 = vpop.permute.xlu0 %494
    %v497 = vadd.f32 %v487, %v495
    %v498 = vtanh.pop %v497
    %500 = vrot.lane.b32.xlu0 %v498, 32
    %v501 = vpop.permute.xlu0 %500
    %v503 = vmul.f32 %v485, %v501
    %505 = vrot.lane.b32.xlu0 %v503, 64
    %v506 = vpop.permute.xlu0 %505
    %v507 = vsel %vm276, %v506, 0
    %509 = vmatprep.subr.mxu0 0.0
    %510 = vmatpush1.msra.mxu0 %v265
    %511 = vmatprep.subr.mxu0 0.0
    %512 = vmatpush1.msra.mxu0 %v266
    %513 = vmatprep.subr.mxu0 0.0
    %514 = vmatpush1.msra.mxu0 %v267
    %515 = vmatprep.subr.mxu0 0.0
    %516 = vmatpush1.msra.mxu0 %v268
    %517 = vmatprep.subr.mxu0 0.0
    %518 = vmatpush1.msra.mxu0 0.0
    %519 = vmatprep.subr.mxu0 0.0
    %520 = vmatpush1.msra.mxu0 0.0
    %521 = vmatprep.subr.mxu0 0.0
    %522 = vmatpush1.msra.mxu0 0.0
    %523 = vmatprep.subr.mxu0 0.0
    %524 = vmatpush1.msra.mxu0 0.0
    %525 = vmatprep.subr.mxu0 0.0
    %526 = vmatpush1.msra.mxu0 0.0
    %527 = vmatprep.subr.mxu0 0.0
    %528 = vmatpush1.msra.mxu0 0.0
    %529 = vmatprep.subr.mxu0 0.0
    %530 = vmatpush1.msra.mxu0 0.0
    %531 = vmatprep.subr.mxu0 0.0
    %532 = vmatpush1.msra.mxu0 0.0
    %533 = vmatprep.subr.mxu0 0.0
    %534 = vmatpush1.msra.mxu0 0.0
    %535 = vmatprep.subr.mxu0 0.0
    %536 = vmatpush1.msra.mxu0 0.0
    %537 = vmatprep.subr.mxu0 0.0
    %538 = vmatpush1.msra.mxu0 0.0
    %539 = vmatprep.subr.mxu0 0.0
    %540 = vmatpush1.msra.mxu0 0.0
    %541 = vmatprep.subr.mxu0 0.0
    %542 = vmatpush1.msra.mxu0 0.0
    %543 = vmatprep.subr.mxu0 0.0
    %544 = vmatpush1.msra.mxu0 0.0
    %545 = vmatprep.subr.mxu0 0.0
    %546 = vmatpush1.msra.mxu0 0.0
    %547 = vmatprep.subr.mxu0 0.0
    %548 = vmatpush1.msra.mxu0 0.0
    %549 = vmatprep.subr.mxu0 0.0
    %550 = vmatpush1.msra.mxu0 0.0
    %551 = vmatprep.subr.mxu0 0.0
    %552 = vmatpush1.msra.mxu0 0.0
    %553 = vmatprep.subr.mxu0 0.0
    %554 = vmatpush1.msra.mxu0 0.0
    %555 = vmatprep.subr.mxu0 0.0
    %556 = vmatpush1.msra.mxu0 0.0
    %557 = vmatprep.subr.mxu0 0.0
    %558 = vmatpush1.msra.mxu0 0.0
    %559 = vmatprep.subr.mxu0 0.0
    %560 = vmatpush1.msra.mxu0 0.0
    %561 = vmatprep.subr.mxu0 0.0
    %562 = vmatpush1.msra.mxu0 0.0
    %563 = vmatprep.subr.mxu0 0.0
    %564 = vmatpush1.msra.mxu0 0.0
    %565 = vmatprep.subr.mxu0 0.0
    %566 = vmatpush1.msra.mxu0 0.0
    %567 = vmatprep.subr.mxu0 0.0
    %568 = vmatpush1.msra.mxu0 0.0
    %569 = vmatprep.subr.mxu0 0.0
    %570 = vmatpush1.msra.mxu0 0.0
    %571 = vmatprep.subr.mxu0 0.0
    %572 = vmatpush1.msra.mxu0 0.0
    %573 = vmatprep.mubr.f32.mxu0 0.0
    %574 = vmatmul.mubr.f32.gmra.mrb[0].mxu0 %v507
    %v575 = vpop.f32.mrb[0].mxu0
    %v576 = vadd.f32 0.0, %v575
    %v577 = vpop.f32.mrb[0].mxu0
    %578 = vdwg.mxu0
    %v579 = vadd.f32 %v373, %v576
    %v580 = vxor.u32 %v579, 2147483648
    %v581 = vmul.f32 %v580, 1.442695
    %v582 = vpow.pop %v581
    %v583 = vadd.f32 %v582, 1.0
    %v584 = vrcp.pop %v583
    %v585 = vmul.f32 1.0, %v584
    %v586 = vtanh.pop %v579
    %v587 = vmul.f32 %v585, %v497
    %589 = vrot.lane.b32.xlu0 %v586, 32
    %v590 = vpop.permute.xlu0 %589
    %v592 = vmul.f32 %v585, %v590
    %594 = vrot.lane.b32.xlu0 %v592, 32
    %v595 = vpop.permute.xlu0 %594
    %v597 = vadd.f32 %v587, %v595
    %v598 = vtanh.pop %v597
    %600 = vrot.lane.b32.xlu0 %v598, 32
    %v601 = vpop.permute.xlu0 %600
    %v603 = vmul.f32 %v585, %v601
    %605 = vrot.lane.b32.xlu0 %v603, 64
    %v606 = vpop.permute.xlu0 %605
    %v607 = vsel %vm276, %v606, 0
    %609 = vmatprep.subr.mxu0 0.0
    %610 = vmatpush1.msra.mxu0 %v265
    %611 = vmatprep.subr.mxu0 0.0
    %612 = vmatpush1.msra.mxu0 %v266
    %613 = vmatprep.subr.mxu0 0.0
    %614 = vmatpush1.msra.mxu0 %v267
    %615 = vmatprep.subr.mxu0 0.0
    %616 = vmatpush1.msra.mxu0 %v268
    %617 = vmatprep.subr.mxu0 0.0
    %618 = vmatpush1.msra.mxu0 0.0
    %619 = vmatprep.subr.mxu0 0.0
    %620 = vmatpush1.msra.mxu0 0.0
    %621 = vmatprep.subr.mxu0 0.0
    %622 = vmatpush1.msra.mxu0 0.0
    %623 = vmatprep.subr.mxu0 0.0
    %624 = vmatpush1.msra.mxu0 0.0
    %625 = vmatprep.subr.mxu0 0.0
    %626 = vmatpush1.msra.mxu0 0.0
    %627 = vmatprep.subr.mxu0 0.0
    %628 = vmatpush1.msra.mxu0 0.0
    %629 = vmatprep.subr.mxu0 0.0
    %630 = vmatpush1.msra.mxu0 0.0
    %631 = vmatprep.subr.mxu0 0.0
    %632 = vmatpush1.msra.mxu0 0.0
    %633 = vmatprep.subr.mxu0 0.0
    %634 = vmatpush1.msra.mxu0 0.0
    %635 = vmatprep.subr.mxu0 0.0
    %636 = vmatpush1.msra.mxu0 0.0
    %637 = vmatprep.subr.mxu0 0.0
    %638 = vmatpush1.msra.mxu0 0.0
    %639 = vmatprep.subr.mxu0 0.0
    %640 = vmatpush1.msra.mxu0 0.0
    %641 = vmatprep.subr.mxu0 0.0
    %642 = vmatpush1.msra.mxu0 0.0
    %643 = vmatprep.subr.mxu0 0.0
    %644 = vmatpush1.msra.mxu0 0.0
    %645 = vmatprep.subr.mxu0 0.0
    %646 = vmatpush1.msra.mxu0 0.0
    %647 = vmatprep.subr.mxu0 0.0
    %648 = vmatpush1.msra.mxu0 0.0
    %649 = vmatprep.subr.mxu0 0.0
    %650 = vmatpush1.msra.mxu0 0.0
    %651 = vmatprep.subr.mxu0 0.0
    %652 = vmatpush1.msra.mxu0 0.0
    %653 = vmatprep.subr.mxu0 0.0
    %654 = vmatpush1.msra.mxu0 0.0
    %655 = vmatprep.subr.mxu0 0.0
    %656 = vmatpush1.msra.mxu0 0.0
    %657 = vmatprep.subr.mxu0 0.0
    %658 = vmatpush1.msra.mxu0 0.0
    %659 = vmatprep.subr.mxu0 0.0
    %660 = vmatpush1.msra.mxu0 0.0
    %661 = vmatprep.subr.mxu0 0.0
    %662 = vmatpush1.msra.mxu0 0.0
    %663 = vmatprep.subr.mxu0 0.0
    %664 = vmatpush1.msra.mxu0 0.0
    %665 = vmatprep.subr.mxu0 0.0
    %666 = vmatpush1.msra.mxu0 0.0
    %667 = vmatprep.subr.mxu0 0.0
    %668 = vmatpush1.msra.mxu0 0.0
    %669 = vmatprep.subr.mxu0 0.0
    %670 = vmatpush1.msra.mxu0 0.0
    %671 = vmatprep.subr.mxu0 0.0
    %672 = vmatpush1.msra.mxu0 0.0
    %673 = vmatprep.mubr.f32.mxu0 0.0
    %674 = vmatmul.mubr.f32.gmra.mrb[0].mxu0 %v607
    %v675 = vpop.f32.mrb[0].mxu0
    %v676 = vadd.f32 0.0, %v675
    %v677 = vpop.f32.mrb[0].mxu0
    %678 = vdwg.mxu0
    %v679 = vadd.f32 %v378, %v676
    %v680 = vxor.u32 %v679, 2147483648
    %v681 = vmul.f32 %v680, 1.442695
    %v682 = vpow.pop %v681
    %v683 = vadd.f32 %v682, 1.0
    %v684 = vrcp.pop %v683
    %v685 = vmul.f32 1.0, %v684
    %v686 = vtanh.pop %v679
    %v687 = vmul.f32 %v685, %v597
    %689 = vrot.lane.b32.xlu0 %v686, 32
    %v690 = vpop.permute.xlu0 %689
    %v692 = vmul.f32 %v685, %v690
    %694 = vrot.lane.b32.xlu0 %v692, 32
    %v695 = vpop.permute.xlu0 %694
    %v697 = vadd.f32 %v687, %v695
    %v698 = vtanh.pop %v697
    %700 = vrot.lane.b32.xlu0 %v698, 32
    %v701 = vpop.permute.xlu0 %700
    %v703 = vmul.f32 %v685, %v701
    %705 = vrot.lane.b32.xlu0 %v703, 64
    %v706 = vpop.permute.xlu0 %705
    %v707 = vsel %vm276, %v706, 0
    %709 = vmatprep.subr.mxu0 0.0
    %710 = vmatpush1.msra.mxu0 %v265
    %711 = vmatprep.subr.mxu0 0.0
    %712 = vmatpush1.msra.mxu0 %v266
    %713 = vmatprep.subr.mxu0 0.0
    %714 = vmatpush1.msra.mxu0 %v267
    %715 = vmatprep.subr.mxu0 0.0
    %716 = vmatpush1.msra.mxu0 %v268
    %717 = vmatprep.subr.mxu0 0.0
    %718 = vmatpush1.msra.mxu0 0.0
    %719 = vmatprep.subr.mxu0 0.0
    %720 = vmatpush1.msra.mxu0 0.0
    %721 = vmatprep.subr.mxu0 0.0
    %722 = vmatpush1.msra.mxu0 0.0
    %723 = vmatprep.subr.mxu0 0.0
    %724 = vmatpush1.msra.mxu0 0.0
    %725 = vmatprep.subr.mxu0 0.0
    %726 = vmatpush1.msra.mxu0 0.0
    %727 = vmatprep.subr.mxu0 0.0
    %728 = vmatpush1.msra.mxu0 0.0
    %729 = vmatprep.subr.mxu0 0.0
    %730 = vmatpush1.msra.mxu0 0.0
    %731 = vmatprep.subr.mxu0 0.0
    %732 = vmatpush1.msra.mxu0 0.0
    %733 = vmatprep.subr.mxu0 0.0
    %734 = vmatpush1.msra.mxu0 0.0
    %735 = vmatprep.subr.mxu0 0.0
    %736 = vmatpush1.msra.mxu0 0.0
    %737 = vmatprep.subr.mxu0 0.0
    %738 = vmatpush1.msra.mxu0 0.0
    %739 = vmatprep.subr.mxu0 0.0
    %740 = vmatpush1.msra.mxu0 0.0
    %741 = vmatprep.subr.mxu0 0.0
    %742 = vmatpush1.msra.mxu0 0.0
    %743 = vmatprep.subr.mxu0 0.0
    %744 = vmatpush1.msra.mxu0 0.0
    %745 = vmatprep.subr.mxu0 0.0
    %746 = vmatpush1.msra.mxu0 0.0
    %747 = vmatprep.subr.mxu0 0.0
    %748 = vmatpush1.msra.mxu0 0.0
    %749 = vmatprep.subr.mxu0 0.0
    %750 = vmatpush1.msra.mxu0 0.0
    %751 = vmatprep.subr.mxu0 0.0
    %752 = vmatpush1.msra.mxu0 0.0
    %753 = vmatprep.subr.mxu0 0.0
    %754 = vmatpush1.msra.mxu0 0.0
    %755 = vmatprep.subr.mxu0 0.0
    %756 = vmatpush1.msra.mxu0 0.0
    %757 = vmatprep.subr.mxu0 0.0
    %758 = vmatpush1.msra.mxu0 0.0
    %759 = vmatprep.subr.mxu0 0.0
    %760 = vmatpush1.msra.mxu0 0.0
    %761 = vmatprep.subr.mxu0 0.0
    %762 = vmatpush1.msra.mxu0 0.0
    %763 = vmatprep.subr.mxu0 0.0
    %764 = vmatpush1.msra.mxu0 0.0
    %765 = vmatprep.subr.mxu0 0.0
    %766 = vmatpush1.msra.mxu0 0.0
    %767 = vmatprep.subr.mxu0 0.0
    %768 = vmatpush1.msra.mxu0 0.0
    %769 = vmatprep.subr.mxu0 0.0
    %770 = vmatpush1.msra.mxu0 0.0
    %771 = vmatprep.subr.mxu0 0.0
    %772 = vmatpush1.msra.mxu0 0.0
    %773 = vmatprep.mubr.f32.mxu0 0.0
    %774 = vmatmul.mubr.f32.gmra.mrb[0].mxu0 %v707
    %v775 = vpop.f32.mrb[0].mxu0
    %v776 = vadd.f32 0.0, %v775
    %v777 = vpop.f32.mrb[0].mxu0
    %778 = vdwg.mxu0
    %v779 = vadd.f32 %v383, %v776
    %v780 = vxor.u32 %v779, 2147483648
    %v781 = vmul.f32 %v780, 1.442695
    %v782 = vpow.pop %v781
    %v783 = vadd.f32 %v782, 1.0
    %v784 = vrcp.pop %v783
    %v785 = vmul.f32 1.0, %v784
    %v786 = vtanh.pop %v779
    %v787 = vmul.f32 %v785, %v697
    %789 = vrot.lane.b32.xlu0 %v786, 32
    %v790 = vpop.permute.xlu0 %789
    %v792 = vmul.f32 %v785, %v790
    %794 = vrot.lane.b32.xlu0 %v792, 32
    %v795 = vpop.permute.xlu0 %794
    %v797 = vadd.f32 %v787, %v795
    %v798 = vtanh.pop %v797
    %800 = vrot.lane.b32.xlu0 %v798, 32
    %v801 = vpop.permute.xlu0 %800
    %v803 = vmul.f32 %v785, %v801
    %805 = vrot.lane.b32.xlu0 %v803, 64
    %v806 = vpop.permute.xlu0 %805
    %v807 = vsel %vm276, %v806, 0
    %809 = vmatprep.subr.mxu0 0.0
    %810 = vmatpush1.msra.mxu0 %v265
    %811 = vmatprep.subr.mxu0 0.0
    %812 = vmatpush1.msra.mxu0 %v266
    %813 = vmatprep.subr.mxu0 0.0
    %814 = vmatpush1.msra.mxu0 %v267
    %815 = vmatprep.subr.mxu0 0.0
    %816 = vmatpush1.msra.mxu0 %v268
    %817 = vmatprep.subr.mxu0 0.0
    %818 = vmatpush1.msra.mxu0 0.0
    %819 = vmatprep.subr.mxu0 0.0
    %820 = vmatpush1.msra.mxu0 0.0
    %821 = vmatprep.subr.mxu0 0.0
    %822 = vmatpush1.msra.mxu0 0.0
    %823 = vmatprep.subr.mxu0 0.0
    %824 = vmatpush1.msra.mxu0 0.0
    %825 = vmatprep.subr.mxu0 0.0
    %826 = vmatpush1.msra.mxu0 0.0
    %827 = vmatprep.subr.mxu0 0.0
    %828 = vmatpush1.msra.mxu0 0.0
    %829 = vmatprep.subr.mxu0 0.0
    %830 = vmatpush1.msra.mxu0 0.0
    %831 = vmatprep.subr.mxu0 0.0
    %832 = vmatpush1.msra.mxu0 0.0
    %833 = vmatprep.subr.mxu0 0.0
    %834 = vmatpush1.msra.mxu0 0.0
    %835 = vmatprep.subr.mxu0 0.0
    %836 = vmatpush1.msra.mxu0 0.0
    %837 = vmatprep.subr.mxu0 0.0
    %838 = vmatpush1.msra.mxu0 0.0
    %839 = vmatprep.subr.mxu0 0.0
    %840 = vmatpush1.msra.mxu0 0.0
    %841 = vmatprep.subr.mxu0 0.0
    %842 = vmatpush1.msra.mxu0 0.0
    %843 = vmatprep.subr.mxu0 0.0
    %844 = vmatpush1.msra.mxu0 0.0
    %845 = vmatprep.subr.mxu0 0.0
    %846 = vmatpush1.msra.mxu0 0.0
    %847 = vmatprep.subr.mxu0 0.0
    %848 = vmatpush1.msra.mxu0 0.0
    %849 = vmatprep.subr.mxu0 0.0
    %850 = vmatpush1.msra.mxu0 0.0
    %851 = vmatprep.subr.mxu0 0.0
    %852 = vmatpush1.msra.mxu0 0.0
    %853 = vmatprep.subr.mxu0 0.0
    %854 = vmatpush1.msra.mxu0 0.0
    %855 = vmatprep.subr.mxu0 0.0
    %856 = vmatpush1.msra.mxu0 0.0
    %857 = vmatprep.subr.mxu0 0.0
    %858 = vmatpush1.msra.mxu0 0.0
    %859 = vmatprep.subr.mxu0 0.0
    %860 = vmatpush1.msra.mxu0 0.0
    %861 = vmatprep.subr.mxu0 0.0
    %862 = vmatpush1.msra.mxu0 0.0
    %863 = vmatprep.subr.mxu0 0.0
    %864 = vmatpush1.msra.mxu0 0.0
    %865 = vmatprep.subr.mxu0 0.0
    %866 = vmatpush1.msra.mxu0 0.0
    %867 = vmatprep.subr.mxu0 0.0
    %868 = vmatpush1.msra.mxu0 0.0
    %869 = vmatprep.subr.mxu0 0.0
    %870 = vmatpush1.msra.mxu0 0.0
    %871 = vmatprep.subr.mxu0 0.0
    %872 = vmatpush1.msra.mxu0 0.0
    %873 = vmatprep.mubr.f32.mxu0 0.0
    %874 = vmatmul.mubr.f32.gmra.mrb[0].mxu0 %v807
    %v875 = vpop.f32.mrb[0].mxu0
    %v876 = vadd.f32 0.0, %v875
    %v877 = vpop.f32.mrb[0].mxu0
    %878 = vdwg.mxu0
    %v879 = vadd.f32 %v388, %v876
    %v880 = vxor.u32 %v879, 2147483648
    %v881 = vmul.f32 %v880, 1.442695
    %v882 = vpow.pop %v881
    %v883 = vadd.f32 %v882, 1.0
    %v884 = vrcp.pop %v883
    %v885 = vmul.f32 1.0, %v884
    %v886 = vtanh.pop %v879
    %v887 = vmul.f32 %v885, %v797
    %889 = vrot.lane.b32.xlu0 %v886, 32
    %v890 = vpop.permute.xlu0 %889
    %v892 = vmul.f32 %v885, %v890
    %894 = vrot.lane.b32.xlu0 %v892, 32
    %v895 = vpop.permute.xlu0 %894
    %v897 = vadd.f32 %v887, %v895
    %v898 = vtanh.pop %v897
    %900 = vrot.lane.b32.xlu0 %v898, 32
    %v901 = vpop.permute.xlu0 %900
    %v903 = vmul.f32 %v885, %v901
    %905 = vrot.lane.b32.xlu0 %v903, 64
    %v906 = vpop.permute.xlu0 %905
    %v907 = vsel %vm276, %v906, 0
    %909 = vmatprep.subr.mxu0 0.0
    %910 = vmatpush1.msra.mxu0 %v265
    %911 = vmatprep.subr.mxu0 0.0
    %912 = vmatpush1.msra.mxu0 %v266
    %913 = vmatprep.subr.mxu0 0.0
    %914 = vmatpush1.msra.mxu0 %v267
    %915 = vmatprep.subr.mxu0 0.0
    %916 = vmatpush1.msra.mxu0 %v268
    %917 = vmatprep.subr.mxu0 0.0
    %918 = vmatpush1.msra.mxu0 0.0
    %919 = vmatprep.subr.mxu0 0.0
    %920 = vmatpush1.msra.mxu0 0.0
    %921 = vmatprep.subr.mxu0 0.0
    %922 = vmatpush1.msra.mxu0 0.0
    %923 = vmatprep.subr.mxu0 0.0
    %924 = vmatpush1.msra.mxu0 0.0
    %925 = vmatprep.subr.mxu0 0.0
    %926 = vmatpush1.msra.mxu0 0.0
    %927 = vmatprep.subr.mxu0 0.0
    %928 = vmatpush1.msra.mxu0 0.0
    %929 = vmatprep.subr.mxu0 0.0
    %930 = vmatpush1.msra.mxu0 0.0
    %931 = vmatprep.subr.mxu0 0.0
    %932 = vmatpush1.msra.mxu0 0.0
    %933 = vmatprep.subr.mxu0 0.0
    %934 = vmatpush1.msra.mxu0 0.0
    %935 = vmatprep.subr.mxu0 0.0
    %936 = vmatpush1.msra.mxu0 0.0
    %937 = vmatprep.subr.mxu0 0.0
    %938 = vmatpush1.msra.mxu0 0.0
    %939 = vmatprep.subr.mxu0 0.0
    %940 = vmatpush1.msra.mxu0 0.0
    %941 = vmatprep.subr.mxu0 0.0
    %942 = vmatpush1.msra.mxu0 0.0
    %943 = vmatprep.subr.mxu0 0.0
    %944 = vmatpush1.msra.mxu0 0.0
    %945 = vmatprep.subr.mxu0 0.0
    %946 = vmatpush1.msra.mxu0 0.0
    %947 = vmatprep.subr.mxu0 0.0
    %948 = vmatpush1.msra.mxu0 0.0
    %949 = vmatprep.subr.mxu0 0.0
    %950 = vmatpush1.msra.mxu0 0.0
    %951 = vmatprep.subr.mxu0 0.0
    %952 = vmatpush1.msra.mxu0 0.0
    %953 = vmatprep.subr.mxu0 0.0
    %954 = vmatpush1.msra.mxu0 0.0
    %955 = vmatprep.subr.mxu0 0.0
    %956 = vmatpush1.msra.mxu0 0.0
    %957 = vmatprep.subr.mxu0 0.0
    %958 = vmatpush1.msra.mxu0 0.0
    %959 = vmatprep.subr.mxu0 0.0
    %960 = vmatpush1.msra.mxu0 0.0
    %961 = vmatprep.subr.mxu0 0.0
    %962 = vmatpush1.msra.mxu0 0.0
    %963 = vmatprep.subr.mxu0 0.0
    %964 = vmatpush1.msra.mxu0 0.0
    %965 = vmatprep.subr.mxu0 0.0
    %966 = vmatpush1.msra.mxu0 0.0
    %967 = vmatprep.subr.mxu0 0.0
    %968 = vmatpush1.msra.mxu0 0.0
    %969 = vmatprep.subr.mxu0 0.0
    %970 = vmatpush1.msra.mxu0 0.0
    %971 = vmatprep.subr.mxu0 0.0
    %972 = vmatpush1.msra.mxu0 0.0
    %973 = vmatprep.mubr.f32.mxu0 0.0
    %974 = vmatmul.mubr.f32.gmra.mrb[0].mxu0 %v907
    %v975 = vpop.f32.mrb[0].mxu0
    %v976 = vadd.f32 0.0, %v975
    %v977 = vpop.f32.mrb[0].mxu0
    %978 = vdwg.mxu0
    %v979 = vadd.f32 %v393, %v976
    %v980 = vxor.u32 %v979, 2147483648
    %v981 = vmul.f32 %v980, 1.442695
    %v982 = vpow.pop %v981
    %v983 = vadd.f32 %v982, 1.0
    %v984 = vrcp.pop %v983
    %v985 = vmul.f32 1.0, %v984
    %v986 = vtanh.pop %v979
    %v987 = vmul.f32 %v985, %v897
    %989 = vrot.lane.b32.xlu0 %v986, 32
    %v990 = vpop.permute.xlu0 %989
    %v992 = vmul.f32 %v985, %v990
    %994 = vrot.lane.b32.xlu0 %v992, 32
    %v995 = vpop.permute.xlu0 %994
    %v997 = vadd.f32 %v987, %v995
    %v998 = vtanh.pop %v997
    %1000 = vrot.lane.b32.xlu0 %v998, 32
    %v1001 = vpop.permute.xlu0 %1000
    %v1003 = vmul.f32 %v985, %v1001
    %1005 = vrot.lane.b32.xlu0 %v1003, 64
    %v1006 = vpop.permute.xlu0 %1005
    %v1007 = vsel %vm276, %v1006, 0
    %1009 = vmatprep.subr.mxu0 0.0
    %1010 = vmatpush1.msra.mxu0 %v265
    %1011 = vmatprep.subr.mxu0 0.0
    %1012 = vmatpush1.msra.mxu0 %v266
    %1013 = vmatprep.subr.mxu0 0.0
    %1014 = vmatpush1.msra.mxu0 %v267
    %1015 = vmatprep.subr.mxu0 0.0
    %1016 = vmatpush1.msra.mxu0 %v268
    %1017 = vmatprep.subr.mxu0 0.0
    %1018 = vmatpush1.msra.mxu0 0.0
    %1019 = vmatprep.subr.mxu0 0.0
    %1020 = vmatpush1.msra.mxu0 0.0
    %1021 = vmatprep.subr.mxu0 0.0
    %1022 = vmatpush1.msra.mxu0 0.0
    %1023 = vmatprep.subr.mxu0 0.0
    %1024 = vmatpush1.msra.mxu0 0.0
    %1025 = vmatprep.subr.mxu0 0.0
    %1026 = vmatpush1.msra.mxu0 0.0
    %1027 = vmatprep.subr.mxu0 0.0
    %1028 = vmatpush1.msra.mxu0 0.0
    %1029 = vmatprep.subr.mxu0 0.0
    %1030 = vmatpush1.msra.mxu0 0.0
    %1031 = vmatprep.subr.mxu0 0.0
    %1032 = vmatpush1.msra.mxu0 0.0
    %1033 = vmatprep.subr.mxu0 0.0
    %1034 = vmatpush1.msra.mxu0 0.0
    %1035 = vmatprep.subr.mxu0 0.0
    %1036 = vmatpush1.msra.mxu0 0.0
    %1037 = vmatprep.subr.mxu0 0.0
    %1038 = vmatpush1.msra.mxu0 0.0
    %1039 = vmatprep.subr.mxu0 0.0
    %1040 = vmatpush1.msra.mxu0 0.0
    %1041 = vmatprep.subr.mxu0 0.0
    %1042 = vmatpush1.msra.mxu0 0.0
    %1043 = vmatprep.subr.mxu0 0.0
    %1044 = vmatpush1.msra.mxu0 0.0
    %1045 = vmatprep.subr.mxu0 0.0
    %1046 = vmatpush1.msra.mxu0 0.0
    %1047 = vmatprep.subr.mxu0 0.0
    %1048 = vmatpush1.msra.mxu0 0.0
    %1049 = vmatprep.subr.mxu0 0.0
    %1050 = vmatpush1.msra.mxu0 0.0
    %1051 = vmatprep.subr.mxu0 0.0
    %1052 = vmatpush1.msra.mxu0 0.0
    %1053 = vmatprep.subr.mxu0 0.0
    %1054 = vmatpush1.msra.mxu0 0.0
    %1055 = vmatprep.subr.mxu0 0.0
    %1056 = vmatpush1.msra.mxu0 0.0
    %1057 = vmatprep.subr.mxu0 0.0
    %1058 = vmatpush1.msra.mxu0 0.0
    %1059 = vmatprep.subr.mxu0 0.0
    %1060 = vmatpush1.msra.mxu0 0.0
    %1061 = vmatprep.subr.mxu0 0.0
    %1062 = vmatpush1.msra.mxu0 0.0
    %1063 = vmatprep.subr.mxu0 0.0
    %1064 = vmatpush1.msra.mxu0 0.0
    %1065 = vmatprep.subr.mxu0 0.0
    %1066 = vmatpush1.msra.mxu0 0.0
    %1067 = vmatprep.subr.mxu0 0.0
    %1068 = vmatpush1.msra.mxu0 0.0
    %1069 = vmatprep.subr.mxu0 0.0
    %1070 = vmatpush1.msra.mxu0 0.0
    %1071 = vmatprep.subr.mxu0 0.0
    %1072 = vmatpush1.msra.mxu0 0.0
    %1073 = vmatprep.mubr.f32.mxu0 0.0
    %1074 = vmatmul.mubr.f32.gmra.mrb[0].mxu0 %v1007
    %v1075 = vpop.f32.mrb[0].mxu0
    %v1076 = vadd.f32 0.0, %v1075
    %v1077 = vpop.f32.mrb[0].mxu0
    %1078 = vdwg.mxu0
    %v1079 = vadd.f32 %v398, %v1076
    %v1080 = vxor.u32 %v1079, 2147483648
    %v1081 = vmul.f32 %v1080, 1.442695
    %v1082 = vpow.pop %v1081
    %v1083 = vadd.f32 %v1082, 1.0
    %v1084 = vrcp.pop %v1083
    %v1085 = vmul.f32 1.0, %v1084
    %v1086 = vtanh.pop %v1079
    %v1087 = vmul.f32 %v1085, %v997
    %1089 = vrot.lane.b32.xlu0 %v1086, 32
    %v1090 = vpop.permute.xlu0 %1089
    %v1092 = vmul.f32 %v1085, %v1090
    %1094 = vrot.lane.b32.xlu0 %v1092, 32
    %v1095 = vpop.permute.xlu0 %1094
    %v1097 = vadd.f32 %v1087, %v1095
    %v1098 = vtanh.pop %v1097
    %1100 = vrot.lane.b32.xlu0 %v1098, 32
    %v1101 = vpop.permute.xlu0 %1100
    %v1103 = vmul.f32 %v1085, %v1101
    %1105 = vrot.lane.b32.xlu0 %v1103, 64
    %v1106 = vpop.permute.xlu0 %1105
    %v1107 = vsel %vm276, %v1106, 0
    %1109 = vmatprep.subr.mxu0 0.0
    %1110 = vmatpush1.msra.mxu0 %v265
    %1111 = vmatprep.subr.mxu0 0.0
    %1112 = vmatpush1.msra.mxu0 %v266
    %1113 = vmatprep.subr.mxu0 0.0
    %1114 = vmatpush1.msra.mxu0 %v267
    %1115 = vmatprep.subr.mxu0 0.0
    %1116 = vmatpush1.msra.mxu0 %v268
    %1117 = vmatprep.subr.mxu0 0.0
    %1118 = vmatpush1.msra.mxu0 0.0
    %1119 = vmatprep.subr.mxu0 0.0
    %1120 = vmatpush1.msra.mxu0 0.0
    %1121 = vmatprep.subr.mxu0 0.0
    %1122 = vmatpush1.msra.mxu0 0.0
    %1123 = vmatprep.subr.mxu0 0.0
    %1124 = vmatpush1.msra.mxu0 0.0
    %1125 = vmatprep.subr.mxu0 0.0
    %1126 = vmatpush1.msra.mxu0 0.0
    %1127 = vmatprep.subr.mxu0 0.0
    %1128 = vmatpush1.msra.mxu0 0.0
    %1129 = vmatprep.subr.mxu0 0.0
    %1130 = vmatpush1.msra.mxu0 0.0
    %1131 = vmatprep.subr.mxu0 0.0
    %1132 = vmatpush1.msra.mxu0 0.0
    %1133 = vmatprep.subr.mxu0 0.0
    %1134 = vmatpush1.msra.mxu0 0.0
    %1135 = vmatprep.subr.mxu0 0.0
    %1136 = vmatpush1.msra.mxu0 0.0
    %1137 = vmatprep.subr.mxu0 0.0
    %1138 = vmatpush1.msra.mxu0 0.0
    %1139 = vmatprep.subr.mxu0 0.0
    %1140 = vmatpush1.msra.mxu0 0.0
    %1141 = vmatprep.subr.mxu0 0.0
    %1142 = vmatpush1.msra.mxu0 0.0
    %1143 = vmatprep.subr.mxu0 0.0
    %1144 = vmatpush1.msra.mxu0 0.0
    %1145 = vmatprep.subr.mxu0 0.0
    %1146 = vmatpush1.msra.mxu0 0.0
    %1147 = vmatprep.subr.mxu0 0.0
    %1148 = vmatpush1.msra.mxu0 0.0
    %1149 = vmatprep.subr.mxu0 0.0
    %1150 = vmatpush1.msra.mxu0 0.0
    %1151 = vmatprep.subr.mxu0 0.0
    %1152 = vmatpush1.msra.mxu0 0.0
    %1153 = vmatprep.subr.mxu0 0.0
    %1154 = vmatpush1.msra.mxu0 0.0
    %1155 = vmatprep.subr.mxu0 0.0
    %1156 = vmatpush1.msra.mxu0 0.0
    %1157 = vmatprep.subr.mxu0 0.0
    %1158 = vmatpush1.msra.mxu0 0.0
    %1159 = vmatprep.subr.mxu0 0.0
    %1160 = vmatpush1.msra.mxu0 0.0
    %1161 = vmatprep.subr.mxu0 0.0
    %1162 = vmatpush1.msra.mxu0 0.0
    %1163 = vmatprep.subr.mxu0 0.0
    %1164 = vmatpush1.msra.mxu0 0.0
    %1165 = vmatprep.subr.mxu0 0.0
    %1166 = vmatpush1.msra.mxu0 0.0
    %1167 = vmatprep.subr.mxu0 0.0
    %1168 = vmatpush1.msra.mxu0 0.0
    %1169 = vmatprep.subr.mxu0 0.0
    %1170 = vmatpush1.msra.mxu0 0.0
    %1171 = vmatprep.subr.mxu0 0.0
    %1172 = vmatpush1.msra.mxu0 0.0
    %1173 = vmatprep.mubr.f32.mxu0 0.0
    %1174 = vmatmul.mubr.f32.gmra.mrb[0].mxu0 %v1107
    %v1175 = vpop.f32.mrb[0].mxu0
    %v1176 = vadd.f32 0.0, %v1175
    %v1177 = vpop.f32.mrb[0].mxu0
    %1178 = vdwg.mxu0
    %v1179 = vadd.f32 %v403, %v1176
    %v1180 = vxor.u32 %v1179, 2147483648
    %v1181 = vmul.f32 %v1180, 1.442695
    %v1182 = vpow.pop %v1181
    %v1183 = vadd.f32 %v1182, 1.0
    %v1184 = vrcp.pop %v1183
    %v1185 = vmul.f32 1.0, %v1184
    %v1186 = vtanh.pop %v1179
    %v1187 = vmul.f32 %v1185, %v1097
    %1189 = vrot.lane.b32.xlu0 %v1186, 32
    %v1190 = vpop.permute.xlu0 %1189
    %v1192 = vmul.f32 %v1185, %v1190
    %1194 = vrot.lane.b32.xlu0 %v1192, 32
    %v1195 = vpop.permute.xlu0 %1194
    %v1197 = vadd.f32 %v1187, %v1195
    %v1198 = vtanh.pop %v1197
    %1200 = vrot.lane.b32.xlu0 %v1198, 32
    %v1201 = vpop.permute.xlu0 %1200
    %v1203 = vmul.f32 %v1185, %v1201
    %v1204 = vld [vmem:[#allocation5] sm:$0xff]
    %v1205 = vld [vmem:[#allocation5 + $0x8] sm:$0xff]
    %v1206 = vld [vmem:[#allocation5 + $0x10] sm:$0xff]
    %v1207 = vld [vmem:[#allocation5 + $0x18] sm:$0xff]
    %v1208 = vld [vmem:[#allocation7] sm:$0xff]
    %v1209 = vld [vmem:[#allocation7 + $0x8] sm:$0xff]
    %v1210 = vld [vmem:[#allocation7 + $0x10] sm:$0xff]
    %v1211 = vld [vmem:[#allocation7 + $0x18] sm:$0xff]
    %v1212 = vld [vmem:[%s7] sm:$0x1]
    %v1214 = vlaneseq
    %v1215 = vshrl.u32 %v1214, 7
    %v1216 = vsub.s32 0, %v1215
    %v1217 = vrot.slane %v1212, %v1216
    %1220 = vrot.lane.b32.xlu0 %v1203, 64
    %v1221 = vpop.permute.xlu0 %1220
    %v1222 = vsel %vm276, %v1221, 0
    %1224 = vmatprep.subr.mxu0 0.0
    %1225 = vmatpush1.msra.mxu0 %v1204
    %1226 = vmatprep.subr.mxu0 0.0
    %1227 = vmatpush1.msra.mxu0 %v1205
    %1228 = vmatprep.subr.mxu0 0.0
    %1229 = vmatpush1.msra.mxu0 %v1206
    %1230 = vmatprep.subr.mxu0 0.0
    %1231 = vmatpush1.msra.mxu0 %v1207
    %1232 = vmatprep.subr.mxu0 0.0
    %1233 = vmatpush1.msra.mxu0 0.0
    %1234 = vmatprep.subr.mxu0 0.0
    %1235 = vmatpush1.msra.mxu0 0.0
    %1236 = vmatprep.subr.mxu0 0.0
    %1237 = vmatpush1.msra.mxu0 0.0
    %1238 = vmatprep.subr.mxu0 0.0
    %1239 = vmatpush1.msra.mxu0 0.0
    %1240 = vmatprep.subr.mxu0 0.0
    %1241 = vmatpush1.msra.mxu0 0.0
    %1242 = vmatprep.subr.mxu0 0.0
    %1243 = vmatpush1.msra.mxu0 0.0
    %1244 = vmatprep.subr.mxu0 0.0
    %1245 = vmatpush1.msra.mxu0 0.0
    %1246 = vmatprep.subr.mxu0 0.0
    %1247 = vmatpush1.msra.mxu0 0.0
    %1248 = vmatprep.subr.mxu0 0.0
    %1249 = vmatpush1.msra.mxu0 0.0
    %1250 = vmatprep.subr.mxu0 0.0
    %1251 = vmatpush1.msra.mxu0 0.0
    %1252 = vmatprep.subr.mxu0 0.0
    %1253 = vmatpush1.msra.mxu0 0.0
    %1254 = vmatprep.subr.mxu0 0.0
    %1255 = vmatpush1.msra.mxu0 0.0
    %1256 = vmatprep.subr.mxu0 0.0
    %1257 = vmatpush1.msra.mxu0 0.0
    %1258 = vmatprep.subr.mxu0 0.0
    %1259 = vmatpush1.msra.mxu0 0.0
    %1260 = vmatprep.subr.mxu0 0.0
    %1261 = vmatpush1.msra.mxu0 0.0
    %1262 = vmatprep.subr.mxu0 0.0
    %1263 = vmatpush1.msra.mxu0 0.0
    %1264 = vmatprep.subr.mxu0 0.0
    %1265 = vmatpush1.msra.mxu0 0.0
    %1266 = vmatprep.subr.mxu0 0.0
    %1267 = vmatpush1.msra.mxu0 0.0
    %1268 = vmatprep.subr.mxu0 0.0
    %1269 = vmatpush1.msra.mxu0 0.0
    %1270 = vmatprep.subr.mxu0 0.0
    %1271 = vmatpush1.msra.mxu0 0.0
    %1272 = vmatprep.subr.mxu0 0.0
    %1273 = vmatpush1.msra.mxu0 0.0
    %1274 = vmatprep.subr.mxu0 0.0
    %1275 = vmatpush1.msra.mxu0 0.0
    %1276 = vmatprep.subr.mxu0 0.0
    %1277 = vmatpush1.msra.mxu0 0.0
    %1278 = vmatprep.subr.mxu0 0.0
    %1279 = vmatpush1.msra.mxu0 0.0
    %1280 = vmatprep.subr.mxu0 0.0
    %1281 = vmatpush1.msra.mxu0 0.0
    %1282 = vmatprep.subr.mxu0 0.0
    %1283 = vmatpush1.msra.mxu0 0.0
    %1284 = vmatprep.subr.mxu0 0.0
    %1285 = vmatpush1.msra.mxu0 0.0
    %1286 = vmatprep.subr.mxu0 0.0
    %1287 = vmatpush1.msra.mxu0 0.0
    %1288 = vmatprep.mubr.f32.mxu0 0.0
    %1289 = vmatmul.mubr.f32.gmra.mrb[0].mxu0 %v507
    %v1290 = vpop.f32.mrb[0].mxu0
    %v1291 = vadd.f32 %v1217, %v1290
    %v1292 = vpop.f32.mrb[0].mxu0
    %1293 = vmatprep.mubr.f32.mxu0 0.0
    %1294 = vmatmul.mubr.f32.gmra.mrb[0].mxu0 %v607
    %v1295 = vpop.f32.mrb[0].mxu0
    %v1296 = vadd.f32 %v1217, %v1295
    %v1297 = vpop.f32.mrb[0].mxu0
    %1298 = vmatprep.mubr.f32.mxu0 0.0
    %1299 = vmatmul.mubr.f32.gmra.mrb[0].mxu0 %v707
    %v1300 = vpop.f32.mrb[0].mxu0
    %v1301 = vadd.f32 %v1217, %v1300
    %v1302 = vpop.f32.mrb[0].mxu0
    %1303 = vmatprep.mubr.f32.mxu0 0.0
    %1304 = vmatmul.mubr.f32.gmra.mrb[0].mxu0 %v807
    %v1305 = vpop.f32.mrb[0].mxu0
    %v1306 = vadd.f32 %v1217, %v1305
    %v1307 = vpop.f32.mrb[0].mxu0
    %1308 = vmatprep.mubr.f32.mxu0 0.0
    %1309 = vmatmul.mubr.f32.gmra.mrb[0].mxu0 %v907
    %v1310 = vpop.f32.mrb[0].mxu0
    %v1311 = vadd.f32 %v1217, %v1310
    %v1312 = vpop.f32.mrb[0].mxu0
    %1313 = vmatprep.mubr.f32.mxu0 0.0
    %1314 = vmatmul.mubr.f32.gmra.mrb[0].mxu0 %v1007
    %v1315 = vpop.f32.mrb[0].mxu0
    %v1316 = vadd.f32 %v1217, %v1315
    %v1317 = vpop.f32.mrb[0].mxu0
    %1318 = vmatprep.mubr.f32.mxu0 0.0
    %1319 = vmatmul.mubr.f32.gmra.mrb[0].mxu0 %v1107
    %v1320 = vpop.f32.mrb[0].mxu0
    %v1321 = vadd.f32 %v1217, %v1320
    %v1322 = vpop.f32.mrb[0].mxu0
    %1323 = vmatprep.mubr.f32.mxu0 0.0
    %1324 = vmatmul.mubr.f32.gmra.mrb[0].mxu0 %v1222
    %v1325 = vpop.f32.mrb[0].mxu0
    %v1326 = vadd.f32 %v1217, %v1325
    %v1327 = vpop.f32.mrb[0].mxu0
    %1328 = vdwg.mxu0
    %1329 = vmatprep.subr.mxu0 0.0
    %1330 = vmatpush1.msra.mxu0 %v1208
    %1331 = vmatprep.subr.mxu0 0.0
    %1332 = vmatpush1.msra.mxu0 %v1209
    %1333 = vmatprep.subr.mxu0 0.0
    %1334 = vmatpush1.msra.mxu0 %v1210
    %1335 = vmatprep.subr.mxu0 0.0
    %1336 = vmatpush1.msra.mxu0 %v1211
    %1337 = vmatprep.subr.mxu0 0.0
    %1338 = vmatpush1.msra.mxu0 0.0
    %1339 = vmatprep.subr.mxu0 0.0
    %1340 = vmatpush1.msra.mxu0 0.0
    %1341 = vmatprep.subr.mxu0 0.0
    %1342 = vmatpush1.msra.mxu0 0.0
    %1343 = vmatprep.subr.mxu0 0.0
    %1344 = vmatpush1.msra.mxu0 0.0
    %1345 = vmatprep.subr.mxu0 0.0
    %1346 = vmatpush1.msra.mxu0 0.0
    %1347 = vmatprep.subr.mxu0 0.0
    %1348 = vmatpush1.msra.mxu0 0.0
    %1349 = vmatprep.subr.mxu0 0.0
    %1350 = vmatpush1.msra.mxu0 0.0
    %1351 = vmatprep.subr.mxu0 0.0
    %1352 = vmatpush1.msra.mxu0 0.0
    %1353 = vmatprep.subr.mxu0 0.0
    %1354 = vmatpush1.msra.mxu0 0.0
    %1355 = vmatprep.subr.mxu0 0.0
    %1356 = vmatpush1.msra.mxu0 0.0
    %1357 = vmatprep.subr.mxu0 0.0
    %1358 = vmatpush1.msra.mxu0 0.0
    %1359 = vmatprep.subr.mxu0 0.0
    %1360 = vmatpush1.msra.mxu0 0.0
    %1361 = vmatprep.subr.mxu0 0.0
    %1362 = vmatpush1.msra.mxu0 0.0
    %1363 = vmatprep.subr.mxu0 0.0
    %1364 = vmatpush1.msra.mxu0 0.0
    %1365 = vmatprep.subr.mxu0 0.0
    %1366 = vmatpush1.msra.mxu0 0.0
    %1367 = vmatprep.subr.mxu0 0.0
    %1368 = vmatpush1.msra.mxu0 0.0
    %1369 = vmatprep.subr.mxu0 0.0
    %1370 = vmatpush1.msra.mxu0 0.0
    %1371 = vmatprep.subr.mxu0 0.0
    %1372 = vmatpush1.msra.mxu0 0.0
    %1373 = vmatprep.subr.mxu0 0.0
    %1374 = vmatpush1.msra.mxu0 0.0
    %1375 = vmatprep.subr.mxu0 0.0
    %1376 = vmatpush1.msra.mxu0 0.0
    %1377 = vmatprep.subr.mxu0 0.0
    %1378 = vmatpush1.msra.mxu0 0.0
    %1379 = vmatprep.subr.mxu0 0.0
    %1380 = vmatpush1.msra.mxu0 0.0
    %1381 = vmatprep.subr.mxu0 0.0
    %1382 = vmatpush1.msra.mxu0 0.0
    %1383 = vmatprep.subr.mxu0 0.0
    %1384 = vmatpush1.msra.mxu0 0.0
    %1385 = vmatprep.subr.mxu0 0.0
    %1386 = vmatpush1.msra.mxu0 0.0
    %1387 = vmatprep.subr.mxu0 0.0
    %1388 = vmatpush1.msra.mxu0 0.0
    %1389 = vmatprep.subr.mxu0 0.0
    %1390 = vmatpush1.msra.mxu0 0.0
    %1391 = vmatprep.subr.mxu0 0.0
    %1392 = vmatpush1.msra.mxu0 0.0
    %1393 = vmatprep.mubr.f32.mxu0 0.0
    %1394 = vmatmul.mubr.f32.gmra.mrb[0].mxu0 %v407
    %v1395 = vpop.f32.mrb[0].mxu0
    %v1396 = vadd.f32 0.0, %v1395
    %v1397 = vpop.f32.mrb[0].mxu0
    %1398 = vdwg.mxu0
    %v1399 = vadd.f32 %v1291, %v1396
    %v1400 = vxor.u32 %v1399, 2147483648
    %v1401 = vmul.f32 %v1400, 1.442695
    %v1402 = vpow.pop %v1401
    %v1403 = vadd.f32 %v1402, 1.0
    %v1404 = vrcp.pop %v1403
    %v1405 = vmul.f32 1.0, %v1404
    %v1406 = vtanh.pop %v1399
    %v1407 = vmul.f32 %v1405, 0.0
    %1409 = vrot.lane.b32.xlu0 %v1406, 32
    %v1410 = vpop.permute.xlu0 %1409
    %v1412 = vmul.f32 %v1405, %v1410
    %1414 = vrot.lane.b32.xlu0 %v1412, 32
    %v1415 = vpop.permute.xlu0 %1414
    %v1417 = vadd.f32 %v1407, %v1415
    %v1418 = vtanh.pop %v1417
    %1420 = vrot.lane.b32.xlu0 %v1418, 32
    %v1421 = vpop.permute.xlu0 %1420
    %v1423 = vmul.f32 %v1405, %v1421
    %1425 = vrot.lane.b32.xlu0 %v1423, 64
    %v1426 = vpop.permute.xlu0 %1425
    %v1427 = vsel %vm276, %v1426, 0
    %1429 = vmatprep.subr.mxu0 0.0
    %1430 = vmatpush1.msra.mxu0 %v1208
    %1431 = vmatprep.subr.mxu0 0.0
    %1432 = vmatpush1.msra.mxu0 %v1209
    %1433 = vmatprep.subr.mxu0 0.0
    %1434 = vmatpush1.msra.mxu0 %v1210
    %1435 = vmatprep.subr.mxu0 0.0
    %1436 = vmatpush1.msra.mxu0 %v1211
    %1437 = vmatprep.subr.mxu0 0.0
    %1438 = vmatpush1.msra.mxu0 0.0
    %1439 = vmatprep.subr.mxu0 0.0
    %1440 = vmatpush1.msra.mxu0 0.0
    %1441 = vmatprep.subr.mxu0 0.0
    %1442 = vmatpush1.msra.mxu0 0.0
    %1443 = vmatprep.subr.mxu0 0.0
    %1444 = vmatpush1.msra.mxu0 0.0
    %1445 = vmatprep.subr.mxu0 0.0
    %1446 = vmatpush1.msra.mxu0 0.0
    %1447 = vmatprep.subr.mxu0 0.0
    %1448 = vmatpush1.msra.mxu0 0.0
    %1449 = vmatprep.subr.mxu0 0.0
    %1450 = vmatpush1.msra.mxu0 0.0
    %1451 = vmatprep.subr.mxu0 0.0
    %1452 = vmatpush1.msra.mxu0 0.0
    %1453 = vmatprep.subr.mxu0 0.0
    %1454 = vmatpush1.msra.mxu0 0.0
    %1455 = vmatprep.subr.mxu0 0.0
    %1456 = vmatpush1.msra.mxu0 0.0
    %1457 = vmatprep.subr.mxu0 0.0
    %1458 = vmatpush1.msra.mxu0 0.0
    %1459 = vmatprep.subr.mxu0 0.0
    %1460 = vmatpush1.msra.mxu0 0.0
    %1461 = vmatprep.subr.mxu0 0.0
    %1462 = vmatpush1.msra.mxu0 0.0
    %1463 = vmatprep.subr.mxu0 0.0
    %1464 = vmatpush1.msra.mxu0 0.0
    %1465 = vmatprep.subr.mxu0 0.0
    %1466 = vmatpush1.msra.mxu0 0.0
    %1467 = vmatprep.subr.mxu0 0.0
    %1468 = vmatpush1.msra.mxu0 0.0
    %1469 = vmatprep.subr.mxu0 0.0
    %1470 = vmatpush1.msra.mxu0 0.0
    %1471 = vmatprep.subr.mxu0 0.0
    %1472 = vmatpush1.msra.mxu0 0.0
    %1473 = vmatprep.subr.mxu0 0.0
    %1474 = vmatpush1.msra.mxu0 0.0
    %1475 = vmatprep.subr.mxu0 0.0
    %1476 = vmatpush1.msra.mxu0 0.0
    %1477 = vmatprep.subr.mxu0 0.0
    %1478 = vmatpush1.msra.mxu0 0.0
    %1479 = vmatprep.subr.mxu0 0.0
    %1480 = vmatpush1.msra.mxu0 0.0
    %1481 = vmatprep.subr.mxu0 0.0
    %1482 = vmatpush1.msra.mxu0 0.0
    %1483 = vmatprep.subr.mxu0 0.0
    %1484 = vmatpush1.msra.mxu0 0.0
    %1485 = vmatprep.subr.mxu0 0.0
    %1486 = vmatpush1.msra.mxu0 0.0
    %1487 = vmatprep.subr.mxu0 0.0
    %1488 = vmatpush1.msra.mxu0 0.0
    %1489 = vmatprep.subr.mxu0 0.0
    %1490 = vmatpush1.msra.mxu0 0.0
    %1491 = vmatprep.subr.mxu0 0.0
    %1492 = vmatpush1.msra.mxu0 0.0
    %1493 = vmatprep.mubr.f32.mxu0 0.0
    %1494 = vmatmul.mubr.f32.gmra.mrb[0].mxu0 %v1427
    %v1495 = vpop.f32.mrb[0].mxu0
    %v1496 = vadd.f32 0.0, %v1495
    %v1497 = vpop.f32.mrb[0].mxu0
    %1498 = vdwg.mxu0
    %v1499 = vadd.f32 %v1296, %v1496
    %v1500 = vxor.u32 %v1499, 2147483648
    %v1501 = vmul.f32 %v1500, 1.442695
    %v1502 = vpow.pop %v1501
    %v1503 = vadd.f32 %v1502, 1.0
    %v1504 = vrcp.pop %v1503
    %v1505 = vmul.f32 1.0, %v1504
    %v1506 = vtanh.pop %v1499
    %v1507 = vmul.f32 %v1505, %v1417
    %1509 = vrot.lane.b32.xlu0 %v1506, 32
    %v1510 = vpop.permute.xlu0 %1509
    %v1512 = vmul.f32 %v1505, %v1510
    %1514 = vrot.lane.b32.xlu0 %v1512, 32
    %v1515 = vpop.permute.xlu0 %1514
    %v1517 = vadd.f32 %v1507, %v1515
    %v1518 = vtanh.pop %v1517
    %1520 = vrot.lane.b32.xlu0 %v1518, 32
    %v1521 = vpop.permute.xlu0 %1520
    %v1523 = vmul.f32 %v1505, %v1521
    %1525 = vrot.lane.b32.xlu0 %v1523, 64
    %v1526 = vpop.permute.xlu0 %1525
    %v1527 = vsel %vm276, %v1526, 0
    %1529 = vmatprep.subr.mxu0 0.0
    %1530 = vmatpush1.msra.mxu0 %v1208
    %1531 = vmatprep.subr.mxu0 0.0
    %1532 = vmatpush1.msra.mxu0 %v1209
    %1533 = vmatprep.subr.mxu0 0.0
    %1534 = vmatpush1.msra.mxu0 %v1210
    %1535 = vmatprep.subr.mxu0 0.0
    %1536 = vmatpush1.msra.mxu0 %v1211
    %1537 = vmatprep.subr.mxu0 0.0
    %1538 = vmatpush1.msra.mxu0 0.0
    %1539 = vmatprep.subr.mxu0 0.0
    %1540 = vmatpush1.msra.mxu0 0.0
    %1541 = vmatprep.subr.mxu0 0.0
    %1542 = vmatpush1.msra.mxu0 0.0
    %1543 = vmatprep.subr.mxu0 0.0
    %1544 = vmatpush1.msra.mxu0 0.0
    %1545 = vmatprep.subr.mxu0 0.0
    %1546 = vmatpush1.msra.mxu0 0.0
    %1547 = vmatprep.subr.mxu0 0.0
    %1548 = vmatpush1.msra.mxu0 0.0
    %1549 = vmatprep.subr.mxu0 0.0
    %1550 = vmatpush1.msra.mxu0 0.0
    %1551 = vmatprep.subr.mxu0 0.0
    %1552 = vmatpush1.msra.mxu0 0.0
    %1553 = vmatprep.subr.mxu0 0.0
    %1554 = vmatpush1.msra.mxu0 0.0
    %1555 = vmatprep.subr.mxu0 0.0
    %1556 = vmatpush1.msra.mxu0 0.0
    %1557 = vmatprep.subr.mxu0 0.0
    %1558 = vmatpush1.msra.mxu0 0.0
    %1559 = vmatprep.subr.mxu0 0.0
    %1560 = vmatpush1.msra.mxu0 0.0
    %1561 = vmatprep.subr.mxu0 0.0
    %1562 = vmatpush1.msra.mxu0 0.0
    %1563 = vmatprep.subr.mxu0 0.0
    %1564 = vmatpush1.msra.mxu0 0.0
    %1565 = vmatprep.subr.mxu0 0.0
    %1566 = vmatpush1.msra.mxu0 0.0
    %1567 = vmatprep.subr.mxu0 0.0
    %1568 = vmatpush1.msra.mxu0 0.0
    %1569 = vmatprep.subr.mxu0 0.0
    %1570 = vmatpush1.msra.mxu0 0.0
    %1571 = vmatprep.subr.mxu0 0.0
    %1572 = vmatpush1.msra.mxu0 0.0
    %1573 = vmatprep.subr.mxu0 0.0
    %1574 = vmatpush1.msra.mxu0 0.0
    %1575 = vmatprep.subr.mxu0 0.0
    %1576 = vmatpush1.msra.mxu0 0.0
    %1577 = vmatprep.subr.mxu0 0.0
    %1578 = vmatpush1.msra.mxu0 0.0
    %1579 = vmatprep.subr.mxu0 0.0
    %1580 = vmatpush1.msra.mxu0 0.0
    %1581 = vmatprep.subr.mxu0 0.0
    %1582 = vmatpush1.msra.mxu0 0.0
    %1583 = vmatprep.subr.mxu0 0.0
    %1584 = vmatpush1.msra.mxu0 0.0
    %1585 = vmatprep.subr.mxu0 0.0
    %1586 = vmatpush1.msra.mxu0 0.0
    %1587 = vmatprep.subr.mxu0 0.0
    %1588 = vmatpush1.msra.mxu0 0.0
    %1589 = vmatprep.subr.mxu0 0.0
    %1590 = vmatpush1.msra.mxu0 0.0
    %1591 = vmatprep.subr.mxu0 0.0
    %1592 = vmatpush1.msra.mxu0 0.0
    %1593 = vmatprep.mubr.f32.mxu0 0.0
    %1594 = vmatmul.mubr.f32.gmra.mrb[0].mxu0 %v1527
    %v1595 = vpop.f32.mrb[0].mxu0
    %v1596 = vadd.f32 0.0, %v1595
    %v1597 = vpop.f32.mrb[0].mxu0
    %1598 = vdwg.mxu0
    %v1599 = vadd.f32 %v1301, %v1596
    %v1600 = vxor.u32 %v1599, 2147483648
    %v1601 = vmul.f32 %v1600, 1.442695
    %v1602 = vpow.pop %v1601
    %v1603 = vadd.f32 %v1602, 1.0
    %v1604 = vrcp.pop %v1603
    %v1605 = vmul.f32 1.0, %v1604
    %v1606 = vtanh.pop %v1599
    %v1607 = vmul.f32 %v1605, %v1517
    %1609 = vrot.lane.b32.xlu0 %v1606, 32
    %v1610 = vpop.permute.xlu0 %1609
    %v1612 = vmul.f32 %v1605, %v1610
    %1614 = vrot.lane.b32.xlu0 %v1612, 32
    %v1615 = vpop.permute.xlu0 %1614
    %v1617 = vadd.f32 %v1607, %v1615
    %v1618 = vtanh.pop %v1617
    %1620 = vrot.lane.b32.xlu0 %v1618, 32
    %v1621 = vpop.permute.xlu0 %1620
    %v1623 = vmul.f32 %v1605, %v1621
    %1625 = vrot.lane.b32.xlu0 %v1623, 64
    %v1626 = vpop.permute.xlu0 %1625
    %v1627 = vsel %vm276, %v1626, 0
    %1629 = vmatprep.subr.mxu0 0.0
    %1630 = vmatpush1.msra.mxu0 %v1208
    %1631 = vmatprep.subr.mxu0 0.0
    %1632 = vmatpush1.msra.mxu0 %v1209
    %1633 = vmatprep.subr.mxu0 0.0
    %1634 = vmatpush1.msra.mxu0 %v1210
    %1635 = vmatprep.subr.mxu0 0.0
    %1636 = vmatpush1.msra.mxu0 %v1211
    %1637 = vmatprep.subr.mxu0 0.0
    %1638 = vmatpush1.msra.mxu0 0.0
    %1639 = vmatprep.subr.mxu0 0.0
    %1640 = vmatpush1.msra.mxu0 0.0
    %1641 = vmatprep.subr.mxu0 0.0
    %1642 = vmatpush1.msra.mxu0 0.0
    %1643 = vmatprep.subr.mxu0 0.0
    %1644 = vmatpush1.msra.mxu0 0.0
    %1645 = vmatprep.subr.mxu0 0.0
    %1646 = vmatpush1.msra.mxu0 0.0
    %1647 = vmatprep.subr.mxu0 0.0
    %1648 = vmatpush1.msra.mxu0 0.0
    %1649 = vmatprep.subr.mxu0 0.0
    %1650 = vmatpush1.msra.mxu0 0.0
    %1651 = vmatprep.subr.mxu0 0.0
    %1652 = vmatpush1.msra.mxu0 0.0
    %1653 = vmatprep.subr.mxu0 0.0
    %1654 = vmatpush1.msra.mxu0 0.0
    %1655 = vmatprep.subr.mxu0 0.0
    %1656 = vmatpush1.msra.mxu0 0.0
    %1657 = vmatprep.subr.mxu0 0.0
    %1658 = vmatpush1.msra.mxu0 0.0
    %1659 = vmatprep.subr.mxu0 0.0
    %1660 = vmatpush1.msra.mxu0 0.0
    %1661 = vmatprep.subr.mxu0 0.0
    %1662 = vmatpush1.msra.mxu0 0.0
    %1663 = vmatprep.subr.mxu0 0.0
    %1664 = vmatpush1.msra.mxu0 0.0
    %1665 = vmatprep.subr.mxu0 0.0
    %1666 = vmatpush1.msra.mxu0 0.0
    %1667 = vmatprep.subr.mxu0 0.0
    %1668 = vmatpush1.msra.mxu0 0.0
    %1669 = vmatprep.subr.mxu0 0.0
    %1670 = vmatpush1.msra.mxu0 0.0
    %1671 = vmatprep.subr.mxu0 0.0
    %1672 = vmatpush1.msra.mxu0 0.0
    %1673 = vmatprep.subr.mxu0 0.0
    %1674 = vmatpush1.msra.mxu0 0.0
    %1675 = vmatprep.subr.mxu0 0.0
    %1676 = vmatpush1.msra.mxu0 0.0
    %1677 = vmatprep.subr.mxu0 0.0
    %1678 = vmatpush1.msra.mxu0 0.0
    %1679 = vmatprep.subr.mxu0 0.0
    %1680 = vmatpush1.msra.mxu0 0.0
    %1681 = vmatprep.subr.mxu0 0.0
    %1682 = vmatpush1.msra.mxu0 0.0
    %1683 = vmatprep.subr.mxu0 0.0
    %1684 = vmatpush1.msra.mxu0 0.0
    %1685 = vmatprep.subr.mxu0 0.0
    %1686 = vmatpush1.msra.mxu0 0.0
    %1687 = vmatprep.subr.mxu0 0.0
    %1688 = vmatpush1.msra.mxu0 0.0
    %1689 = vmatprep.subr.mxu0 0.0
    %1690 = vmatpush1.msra.mxu0 0.0
    %1691 = vmatprep.subr.mxu0 0.0
    %1692 = vmatpush1.msra.mxu0 0.0
    %1693 = vmatprep.mubr.f32.mxu0 0.0
    %1694 = vmatmul.mubr.f32.gmra.mrb[0].mxu0 %v1627
    %v1695 = vpop.f32.mrb[0].mxu0
    %v1696 = vadd.f32 0.0, %v1695
    %v1697 = vpop.f32.mrb[0].mxu0
    %1698 = vdwg.mxu0
    %v1699 = vadd.f32 %v1306, %v1696
    %v1700 = vxor.u32 %v1699, 2147483648
    %v1701 = vmul.f32 %v1700, 1.442695
    %v1702 = vpow.pop %v1701
    %v1703 = vadd.f32 %v1702, 1.0
    %v1704 = vrcp.pop %v1703
    %v1705 = vmul.f32 1.0, %v1704
    %v1706 = vtanh.pop %v1699
    %v1707 = vmul.f32 %v1705, %v1617
    %1709 = vrot.lane.b32.xlu0 %v1706, 32
    %v1710 = vpop.permute.xlu0 %1709
    %v1712 = vmul.f32 %v1705, %v1710
    %1714 = vrot.lane.b32.xlu0 %v1712, 32
    %v1715 = vpop.permute.xlu0 %1714
    %v1717 = vadd.f32 %v1707, %v1715
    %v1718 = vtanh.pop %v1717
    %1720 = vrot.lane.b32.xlu0 %v1718, 32
    %v1721 = vpop.permute.xlu0 %1720
    %v1723 = vmul.f32 %v1705, %v1721
    %1725 = vrot.lane.b32.xlu0 %v1723, 64
    %v1726 = vpop.permute.xlu0 %1725
    %v1727 = vsel %vm276, %v1726, 0
    %1729 = vmatprep.subr.mxu0 0.0
    %1730 = vmatpush1.msra.mxu0 %v1208
    %1731 = vmatprep.subr.mxu0 0.0
    %1732 = vmatpush1.msra.mxu0 %v1209
    %1733 = vmatprep.subr.mxu0 0.0
    %1734 = vmatpush1.msra.mxu0 %v1210
    %1735 = vmatprep.subr.mxu0 0.0
    %1736 = vmatpush1.msra.mxu0 %v1211
    %1737 = vmatprep.subr.mxu0 0.0
    %1738 = vmatpush1.msra.mxu0 0.0
    %1739 = vmatprep.subr.mxu0 0.0
    %1740 = vmatpush1.msra.mxu0 0.0
    %1741 = vmatprep.subr.mxu0 0.0
    %1742 = vmatpush1.msra.mxu0 0.0
    %1743 = vmatprep.subr.mxu0 0.0
    %1744 = vmatpush1.msra.mxu0 0.0
    %1745 = vmatprep.subr.mxu0 0.0
    %1746 = vmatpush1.msra.mxu0 0.0
    %1747 = vmatprep.subr.mxu0 0.0
    %1748 = vmatpush1.msra.mxu0 0.0
    %1749 = vmatprep.subr.mxu0 0.0
    %1750 = vmatpush1.msra.mxu0 0.0
    %1751 = vmatprep.subr.mxu0 0.0
    %1752 = vmatpush1.msra.mxu0 0.0
    %1753 = vmatprep.subr.mxu0 0.0
    %1754 = vmatpush1.msra.mxu0 0.0
    %1755 = vmatprep.subr.mxu0 0.0
    %1756 = vmatpush1.msra.mxu0 0.0
    %1757 = vmatprep.subr.mxu0 0.0
    %1758 = vmatpush1.msra.mxu0 0.0
    %1759 = vmatprep.subr.mxu0 0.0
    %1760 = vmatpush1.msra.mxu0 0.0
    %1761 = vmatprep.subr.mxu0 0.0
    %1762 = vmatpush1.msra.mxu0 0.0
    %1763 = vmatprep.subr.mxu0 0.0
    %1764 = vmatpush1.msra.mxu0 0.0
    %1765 = vmatprep.subr.mxu0 0.0
    %1766 = vmatpush1.msra.mxu0 0.0
    %1767 = vmatprep.subr.mxu0 0.0
    %1768 = vmatpush1.msra.mxu0 0.0
    %1769 = vmatprep.subr.mxu0 0.0
    %1770 = vmatpush1.msra.mxu0 0.0
    %1771 = vmatprep.subr.mxu0 0.0
    %1772 = vmatpush1.msra.mxu0 0.0
    %1773 = vmatprep.subr.mxu0 0.0
    %1774 = vmatpush1.msra.mxu0 0.0
    %1775 = vmatprep.subr.mxu0 0.0
    %1776 = vmatpush1.msra.mxu0 0.0
    %1777 = vmatprep.subr.mxu0 0.0
    %1778 = vmatpush1.msra.mxu0 0.0
    %1779 = vmatprep.subr.mxu0 0.0
    %1780 = vmatpush1.msra.mxu0 0.0
    %1781 = vmatprep.subr.mxu0 0.0
    %1782 = vmatpush1.msra.mxu0 0.0
    %1783 = vmatprep.subr.mxu0 0.0
    %1784 = vmatpush1.msra.mxu0 0.0
    %1785 = vmatprep.subr.mxu0 0.0
    %1786 = vmatpush1.msra.mxu0 0.0
    %1787 = vmatprep.subr.mxu0 0.0
    %1788 = vmatpush1.msra.mxu0 0.0
    %1789 = vmatprep.subr.mxu0 0.0
    %1790 = vmatpush1.msra.mxu0 0.0
    %1791 = vmatprep.subr.mxu0 0.0
    %1792 = vmatpush1.msra.mxu0 0.0
    %1793 = vmatprep.mubr.f32.mxu0 0.0
    %1794 = vmatmul.mubr.f32.gmra.mrb[0].mxu0 %v1727
    %v1795 = vpop.f32.mrb[0].mxu0
    %v1796 = vadd.f32 0.0, %v1795
    %v1797 = vpop.f32.mrb[0].mxu0
    %1798 = vdwg.mxu0
    %v1799 = vadd.f32 %v1311, %v1796
    %v1800 = vxor.u32 %v1799, 2147483648
    %v1801 = vmul.f32 %v1800, 1.442695
    %v1802 = vpow.pop %v1801
    %v1803 = vadd.f32 %v1802, 1.0
    %v1804 = vrcp.pop %v1803
    %v1805 = vmul.f32 1.0, %v1804
    %v1806 = vtanh.pop %v1799
    %v1807 = vmul.f32 %v1805, %v1717
    %1809 = vrot.lane.b32.xlu0 %v1806, 32
    %v1810 = vpop.permute.xlu0 %1809
    %v1812 = vmul.f32 %v1805, %v1810
    %1814 = vrot.lane.b32.xlu0 %v1812, 32
    %v1815 = vpop.permute.xlu0 %1814
    %v1817 = vadd.f32 %v1807, %v1815
    %v1818 = vtanh.pop %v1817
    %1820 = vrot.lane.b32.xlu0 %v1818, 32
    %v1821 = vpop.permute.xlu0 %1820
    %v1823 = vmul.f32 %v1805, %v1821
    %1825 = vrot.lane.b32.xlu0 %v1823, 64
    %v1826 = vpop.permute.xlu0 %1825
    %v1827 = vsel %vm276, %v1826, 0
    %1829 = vmatprep.subr.mxu0 0.0
    %1830 = vmatpush1.msra.mxu0 %v1208
    %1831 = vmatprep.subr.mxu0 0.0
    %1832 = vmatpush1.msra.mxu0 %v1209
    %1833 = vmatprep.subr.mxu0 0.0
    %1834 = vmatpush1.msra.mxu0 %v1210
    %1835 = vmatprep.subr.mxu0 0.0
    %1836 = vmatpush1.msra.mxu0 %v1211
    %1837 = vmatprep.subr.mxu0 0.0
    %1838 = vmatpush1.msra.mxu0 0.0
    %1839 = vmatprep.subr.mxu0 0.0
    %1840 = vmatpush1.msra.mxu0 0.0
    %1841 = vmatprep.subr.mxu0 0.0
    %1842 = vmatpush1.msra.mxu0 0.0
    %1843 = vmatprep.subr.mxu0 0.0
    %1844 = vmatpush1.msra.mxu0 0.0
    %1845 = vmatprep.subr.mxu0 0.0
    %1846 = vmatpush1.msra.mxu0 0.0
    %1847 = vmatprep.subr.mxu0 0.0
    %1848 = vmatpush1.msra.mxu0 0.0
    %1849 = vmatprep.subr.mxu0 0.0
    %1850 = vmatpush1.msra.mxu0 0.0
    %1851 = vmatprep.subr.mxu0 0.0
    %1852 = vmatpush1.msra.mxu0 0.0
    %1853 = vmatprep.subr.mxu0 0.0
    %1854 = vmatpush1.msra.mxu0 0.0
    %1855 = vmatprep.subr.mxu0 0.0
    %1856 = vmatpush1.msra.mxu0 0.0
    %1857 = vmatprep.subr.mxu0 0.0
    %1858 = vmatpush1.msra.mxu0 0.0
    %1859 = vmatprep.subr.mxu0 0.0
    %1860 = vmatpush1.msra.mxu0 0.0
    %1861 = vmatprep.subr.mxu0 0.0
    %1862 = vmatpush1.msra.mxu0 0.0
    %1863 = vmatprep.subr.mxu0 0.0
    %1864 = vmatpush1.msra.mxu0 0.0
    %1865 = vmatprep.subr.mxu0 0.0
    %1866 = vmatpush1.msra.mxu0 0.0
    %1867 = vmatprep.subr.mxu0 0.0
    %1868 = vmatpush1.msra.mxu0 0.0
    %1869 = vmatprep.subr.mxu0 0.0
    %1870 = vmatpush1.msra.mxu0 0.0
    %1871 = vmatprep.subr.mxu0 0.0
    %1872 = vmatpush1.msra.mxu0 0.0
    %1873 = vmatprep.subr.mxu0 0.0
    %1874 = vmatpush1.msra.mxu0 0.0
    %1875 = vmatprep.subr.mxu0 0.0
    %1876 = vmatpush1.msra.mxu0 0.0
    %1877 = vmatprep.subr.mxu0 0.0
    %1878 = vmatpush1.msra.mxu0 0.0
    %1879 = vmatprep.subr.mxu0 0.0
    %1880 = vmatpush1.msra.mxu0 0.0
    %1881 = vmatprep.subr.mxu0 0.0
    %1882 = vmatpush1.msra.mxu0 0.0
    %1883 = vmatprep.subr.mxu0 0.0
    %1884 = vmatpush1.msra.mxu0 0.0
    %1885 = vmatprep.subr.mxu0 0.0
    %1886 = vmatpush1.msra.mxu0 0.0
    %1887 = vmatprep.subr.mxu0 0.0
    %1888 = vmatpush1.msra.mxu0 0.0
    %1889 = vmatprep.subr.mxu0 0.0
    %1890 = vmatpush1.msra.mxu0 0.0
    %1891 = vmatprep.subr.mxu0 0.0
    %1892 = vmatpush1.msra.mxu0 0.0
    %1893 = vmatprep.mubr.f32.mxu0 0.0
    %1894 = vmatmul.mubr.f32.gmra.mrb[0].mxu0 %v1827
    %v1895 = vpop.f32.mrb[0].mxu0
    %v1896 = vadd.f32 0.0, %v1895
    %v1897 = vpop.f32.mrb[0].mxu0
    %1898 = vdwg.mxu0
    %v1899 = vadd.f32 %v1316, %v1896
    %v1900 = vxor.u32 %v1899, 2147483648
    %v1901 = vmul.f32 %v1900, 1.442695
    %v1902 = vpow.pop %v1901
    %v1903 = vadd.f32 %v1902, 1.0
    %v1904 = vrcp.pop %v1903
    %v1905 = vmul.f32 1.0, %v1904
    %v1906 = vtanh.pop %v1899
    %v1907 = vmul.f32 %v1905, %v1817
    %1909 = vrot.lane.b32.xlu0 %v1906, 32
    %v1910 = vpop.permute.xlu0 %1909
    %v1912 = vmul.f32 %v1905, %v1910
    %1914 = vrot.lane.b32.xlu0 %v1912, 32
    %v1915 = vpop.permute.xlu0 %1914
    %v1917 = vadd.f32 %v1907, %v1915
    %v1918 = vtanh.pop %v1917
    %1920 = vrot.lane.b32.xlu0 %v1918, 32
    %v1921 = vpop.permute.xlu0 %1920
    %v1923 = vmul.f32 %v1905, %v1921
    %1925 = vrot.lane.b32.xlu0 %v1923, 64
    %v1926 = vpop.permute.xlu0 %1925
    %v1927 = vsel %vm276, %v1926, 0
    %1929 = vmatprep.subr.mxu0 0.0
    %1930 = vmatpush1.msra.mxu0 %v1208
    %1931 = vmatprep.subr.mxu0 0.0
    %1932 = vmatpush1.msra.mxu0 %v1209
    %1933 = vmatprep.subr.mxu0 0.0
    %1934 = vmatpush1.msra.mxu0 %v1210
    %1935 = vmatprep.subr.mxu0 0.0
    %1936 = vmatpush1.msra.mxu0 %v1211
    %1937 = vmatprep.subr.mxu0 0.0
    %1938 = vmatpush1.msra.mxu0 0.0
    %1939 = vmatprep.subr.mxu0 0.0
    %1940 = vmatpush1.msra.mxu0 0.0
    %1941 = vmatprep.subr.mxu0 0.0
    %1942 = vmatpush1.msra.mxu0 0.0
    %1943 = vmatprep.subr.mxu0 0.0
    %1944 = vmatpush1.msra.mxu0 0.0
    %1945 = vmatprep.subr.mxu0 0.0
    %1946 = vmatpush1.msra.mxu0 0.0
    %1947 = vmatprep.subr.mxu0 0.0
    %1948 = vmatpush1.msra.mxu0 0.0
    %1949 = vmatprep.subr.mxu0 0.0
    %1950 = vmatpush1.msra.mxu0 0.0
    %1951 = vmatprep.subr.mxu0 0.0
    %1952 = vmatpush1.msra.mxu0 0.0
    %1953 = vmatprep.subr.mxu0 0.0
    %1954 = vmatpush1.msra.mxu0 0.0
    %1955 = vmatprep.subr.mxu0 0.0
    %1956 = vmatpush1.msra.mxu0 0.0
    %1957 = vmatprep.subr.mxu0 0.0
    %1958 = vmatpush1.msra.mxu0 0.0
    %1959 = vmatprep.subr.mxu0 0.0
    %1960 = vmatpush1.msra.mxu0 0.0
    %1961 = vmatprep.subr.mxu0 0.0
    %1962 = vmatpush1.msra.mxu0 0.0
    %1963 = vmatprep.subr.mxu0 0.0
    %1964 = vmatpush1.msra.mxu0 0.0
    %1965 = vmatprep.subr.mxu0 0.0
    %1966 = vmatpush1.msra.mxu0 0.0
    %1967 = vmatprep.subr.mxu0 0.0
    %1968 = vmatpush1.msra.mxu0 0.0
    %1969 = vmatprep.subr.mxu0 0.0
    %1970 = vmatpush1.msra.mxu0 0.0
    %1971 = vmatprep.subr.mxu0 0.0
    %1972 = vmatpush1.msra.mxu0 0.0
    %1973 = vmatprep.subr.mxu0 0.0
    %1974 = vmatpush1.msra.mxu0 0.0
    %1975 = vmatprep.subr.mxu0 0.0
    %1976 = vmatpush1.msra.mxu0 0.0
    %1977 = vmatprep.subr.mxu0 0.0
    %1978 = vmatpush1.msra.mxu0 0.0
    %1979 = vmatprep.subr.mxu0 0.0
    %1980 = vmatpush1.msra.mxu0 0.0
    %1981 = vmatprep.subr.mxu0 0.0
    %1982 = vmatpush1.msra.mxu0 0.0
    %1983 = vmatprep.subr.mxu0 0.0
    %1984 = vmatpush1.msra.mxu0 0.0
    %1985 = vmatprep.subr.mxu0 0.0
    %1986 = vmatpush1.msra.mxu0 0.0
    %1987 = vmatprep.subr.mxu0 0.0
    %1988 = vmatpush1.msra.mxu0 0.0
    %1989 = vmatprep.subr.mxu0 0.0
    %1990 = vmatpush1.msra.mxu0 0.0
    %1991 = vmatprep.subr.mxu0 0.0
    %1992 = vmatpush1.msra.mxu0 0.0
    %1993 = vmatprep.mubr.f32.mxu0 0.0
    %1994 = vmatmul.mubr.f32.gmra.mrb[0].mxu0 %v1927
    %v1995 = vpop.f32.mrb[0].mxu0
    %v1996 = vadd.f32 0.0, %v1995
    %v1997 = vpop.f32.mrb[0].mxu0
    %1998 = vdwg.mxu0
    %v1999 = vadd.f32 %v1321, %v1996
    %v2000 = vxor.u32 %v1999, 2147483648
    %v2001 = vmul.f32 %v2000, 1.442695
    %v2002 = vpow.pop %v2001
    %v2003 = vadd.f32 %v2002, 1.0
    %v2004 = vrcp.pop %v2003
    %v2005 = vmul.f32 1.0, %v2004
    %v2006 = vtanh.pop %v1999
    %v2007 = vmul.f32 %v2005, %v1917
    %2009 = vrot.lane.b32.xlu0 %v2006, 32
    %v2010 = vpop.permute.xlu0 %2009
    %v2012 = vmul.f32 %v2005, %v2010
    %2014 = vrot.lane.b32.xlu0 %v2012, 32
    %v2015 = vpop.permute.xlu0 %2014
    %v2017 = vadd.f32 %v2007, %v2015
    %v2018 = vtanh.pop %v2017
    %2020 = vrot.lane.b32.xlu0 %v2018, 32
    %v2021 = vpop.permute.xlu0 %2020
    %v2023 = vmul.f32 %v2005, %v2021
    %2025 = vrot.lane.b32.xlu0 %v2023, 64
    %v2026 = vpop.permute.xlu0 %2025
    %v2027 = vsel %vm276, %v2026, 0
    %2029 = vmatprep.subr.mxu0 0.0
    %2030 = vmatpush1.msra.mxu0 %v1208
    %2031 = vmatprep.subr.mxu0 0.0
    %2032 = vmatpush1.msra.mxu0 %v1209
    %2033 = vmatprep.subr.mxu0 0.0
    %2034 = vmatpush1.msra.mxu0 %v1210
    %2035 = vmatprep.subr.mxu0 0.0
    %2036 = vmatpush1.msra.mxu0 %v1211
    %2037 = vmatprep.subr.mxu0 0.0
    %2038 = vmatpush1.msra.mxu0 0.0
    %2039 = vmatprep.subr.mxu0 0.0
    %2040 = vmatpush1.msra.mxu0 0.0
    %2041 = vmatprep.subr.mxu0 0.0
    %2042 = vmatpush1.msra.mxu0 0.0
    %2043 = vmatprep.subr.mxu0 0.0
    %2044 = vmatpush1.msra.mxu0 0.0
    %2045 = vmatprep.subr.mxu0 0.0
    %2046 = vmatpush1.msra.mxu0 0.0
    %2047 = vmatprep.subr.mxu0 0.0
    %2048 = vmatpush1.msra.mxu0 0.0
    %2049 = vmatprep.subr.mxu0 0.0
    %2050 = vmatpush1.msra.mxu0 0.0
    %2051 = vmatprep.subr.mxu0 0.0
    %2052 = vmatpush1.msra.mxu0 0.0
    %2053 = vmatprep.subr.mxu0 0.0
    %2054 = vmatpush1.msra.mxu0 0.0
    %2055 = vmatprep.subr.mxu0 0.0
    %2056 = vmatpush1.msra.mxu0 0.0
    %2057 = vmatprep.subr.mxu0 0.0
    %2058 = vmatpush1.msra.mxu0 0.0
    %2059 = vmatprep.subr.mxu0 0.0
    %2060 = vmatpush1.msra.mxu0 0.0
    %2061 = vmatprep.subr.mxu0 0.0
    %2062 = vmatpush1.msra.mxu0 0.0
    %2063 = vmatprep.subr.mxu0 0.0
    %2064 = vmatpush1.msra.mxu0 0.0
    %2065 = vmatprep.subr.mxu0 0.0
    %2066 = vmatpush1.msra.mxu0 0.0
    %2067 = vmatprep.subr.mxu0 0.0
    %2068 = vmatpush1.msra.mxu0 0.0
    %2069 = vmatprep.subr.mxu0 0.0
    %2070 = vmatpush1.msra.mxu0 0.0
    %2071 = vmatprep.subr.mxu0 0.0
    %2072 = vmatpush1.msra.mxu0 0.0
    %2073 = vmatprep.subr.mxu0 0.0
    %2074 = vmatpush1.msra.mxu0 0.0
    %2075 = vmatprep.subr.mxu0 0.0
    %2076 = vmatpush1.msra.mxu0 0.0
    %2077 = vmatprep.subr.mxu0 0.0
    %2078 = vmatpush1.msra.mxu0 0.0
    %2079 = vmatprep.subr.mxu0 0.0
    %2080 = vmatpush1.msra.mxu0 0.0
    %2081 = vmatprep.subr.mxu0 0.0
    %2082 = vmatpush1.msra.mxu0 0.0
    %2083 = vmatprep.subr.mxu0 0.0
    %2084 = vmatpush1.msra.mxu0 0.0
    %2085 = vmatprep.subr.mxu0 0.0
    %2086 = vmatpush1.msra.mxu0 0.0
    %2087 = vmatprep.subr.mxu0 0.0
    %2088 = vmatpush1.msra.mxu0 0.0
    %2089 = vmatprep.subr.mxu0 0.0
    %2090 = vmatpush1.msra.mxu0 0.0
    %2091 = vmatprep.subr.mxu0 0.0
    %2092 = vmatpush1.msra.mxu0 0.0
    %2093 = vmatprep.mubr.f32.mxu0 0.0
    %2094 = vmatmul.mubr.f32.gmra.mrb[0].mxu0 %v2027
    %v2095 = vpop.f32.mrb[0].mxu0
    %v2096 = vadd.f32 0.0, %v2095
    %v2097 = vpop.f32.mrb[0].mxu0
    %2098 = vdwg.mxu0
    %v2099 = vadd.f32 %v1326, %v2096
    %v2100 = vxor.u32 %v2099, 2147483648
    %v2101 = vmul.f32 %v2100, 1.442695
    %v2102 = vpow.pop %v2101
    %v2103 = vadd.f32 %v2102, 1.0
    %v2104 = vrcp.pop %v2103
    %v2105 = vmul.f32 1.0, %v2104
    %v2106 = vtanh.pop %v2099
    %v2107 = vmul.f32 %v2105, %v2017
    %2109 = vrot.lane.b32.xlu0 %v2106, 32
    %v2110 = vpop.permute.xlu0 %2109
    %v2112 = vmul.f32 %v2105, %v2110
    %2114 = vrot.lane.b32.xlu0 %v2112, 32
    %v2115 = vpop.permute.xlu0 %2114
    %v2117 = vadd.f32 %v2107, %v2115
    %v2118 = vtanh.pop %v2117
    %2120 = vrot.lane.b32.xlu0 %v2118, 32
    %v2121 = vpop.permute.xlu0 %2120
    %v2123 = vmul.f32 %v2105, %v2121
    %2125 = vrot.lane.b32.xlu0 %v1523, 96
    %v2126 = vpop.permute.xlu0 %2125
    %2128 = vrot.lane.b32.xlu0 %v1723, 32
    %v2129 = vpop.permute.xlu0 %2128
    %2132 = vrot.lane.b32.xlu0 %v1923, 96
    %v2133 = vpop.permute.xlu0 %2132
    %2136 = vrot.lane.b32.xlu0 %v2123, 32
    %v2137 = vpop.permute.xlu0 %2136
    %2141 = vrot.lane.b32.xlu0 %v2117, 64
    %v2142 = vpop.permute.xlu0 %2141
    %v2144 = vsel %vm276, %v1426, %v2126
    %vm2145 = vcmask 523264
    %v2146 = vsel %vm2145, %v2144, %v1623
    %vm2147 = vcmask 785408
    %v2148 = vsel %vm2147, %v2146, %v2129
    %v2149 = vsel %vm276, %v1826, %v2133
    %v2150 = vsel %vm2145, %v2149, %v2023
    %v2151 = vsel %vm2147, %v2150, %v2137
    %v2152 = vsel %vm276, %v1221, %v1197
    %v2153 = vsel %vm2145, %v2152, %v2123
    %v2154 = vsel %vm2147, %v2153, %v2142
    %2155 = vst [vmem:[#allocation8] sm:$0xff] %v2148
    %2156 = vst [vmem:[#allocation8 + $0x8] sm:$0xff] %v2151
    %2157 = vst [vmem:[#allocation8 + $0x10] sm:$0xff] %v2154
    // Predicated region
    $region46: #{tpu_custom_call.1} parent=1 // pred_check
      _
    $region47: #{tpu_custom_call.1} parent=1 // pred_check_branch
      %2159 = sbr.rel (0) target = $region49
    $region48: #{tpu_custom_call.1} parent=1 // pred_region
      %s2161 = ssub.s32 384, 384
      %2162 = vsyncadd [#allocation4], %s2161
      %s2164 = sshll.u32 [#allocation8], 4
      %s2165 = int_to_ptr.vmem [resolvable:$true] %s2164
      %2167 = dma.vmem_to_hbm [thread:$0]  %s2165, 384, %s8, [#allocation4]
    $region49: #{tpu_custom_call.1} parent=1 // pred_fallthru
      _
    // Predicated region
    $region50: #{tpu_custom_call.1} parent=1 // pred_check
      _
    $region51: #{tpu_custom_call.1} parent=1 // pred_check_branch
      %2169 = sbr.rel (0) target = $region53
    $region52: #{tpu_custom_call.1} parent=1 // pred_region
      %2170 = dma.done [#allocation4], 384
    $region53: #{tpu_custom_call.1} parent=1 // pred_fallthru
      _
    %2171 = vsyncpa [#allocation3], 1
    %2172 = vsyncpa [#allocation6], 1
    %2173 = vsyncpa [#allocation4], 1

</llo_original>
